<compile_context>
chip_gen: v6e
topology: v6e:2x2x1
jax: 0.10.0
libtpu: 0.0.40
codegen_flags: <defaults>
</compile_context>

<pallas_src>
import jax
import jax.numpy as jnp
from jax import lax
from jax.experimental import pallas as pl
from jax.experimental.pallas import tpu as pltpu


def _zero_border(pad_ref):
    """Zero only the 1-element border of a (Hp, Wp, C) padded scratch buffer."""
    Hp, Wp, C = pad_ref.shape
    dt = pad_ref.dtype
    pad_ref[0:1, :, :] = jnp.zeros((1, Wp, C), dt)
    pad_ref[Hp - 1:Hp, :, :] = jnp.zeros((1, Wp, C), dt)
    pad_ref[:, 0:1, :] = jnp.zeros((Hp, 1, C), dt)
    pad_ref[:, Wp - 1:Wp, :] = jnp.zeros((Hp, 1, C), dt)


def _conv3x3(pad_ref, w_ref, Hh, Wh, cout):
    """3x3 conv (padding already materialized in pad_ref) as 9 whole-tile matmuls.

    pad_ref: (Hh+2, Wh+2, cin) f32 scratch; w_ref: (3, 3, cin, cout) bf16.
    Returns (Hh*Wh, cout) f32 accumulator.
    """
    p = pad_ref[...]                                   # (Hh+2, Wh+2, cin) f32
    cin = p.shape[-1]
    acc = jnp.zeros((Hh * Wh, cout), jnp.float32)
    for dy in range(3):
        for dx in range(3):
            patch = lax.slice(p, (dy, dx, 0), (dy + Hh, dx + Wh, cin))  # (Hh, Wh, cin)
            lhs = patch.reshape(Hh * Wh, cin).astype(jnp.bfloat16)
            acc = acc + jnp.dot(lhs, w_ref[dy, dx],
                                preferred_element_type=jnp.float32)
    return acc


def down_kernel(x_ref, w1_ref, w2_ref, s1_ref, b1_ref, s2_ref, b2_ref,
                o_ref, pad1_ref, pad2_ref):
    # x_ref   : (1, Hh, 2, Wh, 2*Cin) bf16  -- pooling-friendly view of one NHWC image
    # w1_ref  : (3, 3, Cin, Cmid)  bf16 conv1 weights (HWIO)
    # w2_ref  : (3, 3, Cmid, Cout) bf16 conv2 weights (HWIO)
    # s*/b*   : (1, C) f32 folded BatchNorm scale / shift
    # o_ref   : (1, Hh, Wh, Cout) f32
    # pad1_ref: (Hh+2, Wh+2, Cin)  f32 zero-bordered pooled activations (VMEM scratch)
    # pad2_ref: (Hh+2, Wh+2, Cmid) f32 zero-bordered conv1 output (VMEM scratch)
    _, Hh, Wh, Cout = o_ref.shape
    Cin = pad1_ref.shape[-1]
    Cmid = pad2_ref.shape[-1]

    # Only the border needs zeros; interior is fully rewritten every grid step.
    _zero_border(pad1_ref)
    _zero_border(pad2_ref)

    # ---- MaxPool2d(kernel=2, stride=2): pure VPU, no matmuls ----------------
    xa = x_ref[0]                                      # (Hh, 2, Wh, 2*Cin)
    rowmax = jnp.maximum(xa[:, 0], xa[:, 1])           # (Hh, Wh, 2*Cin)  even vs odd rows
    pooled = jnp.maximum(rowmax[:, :, :Cin],           # even columns (lane half 0)
                         rowmax[:, :, Cin:])           # odd columns  (lane half 1)
    pad1_ref[1:Hh + 1, 1:Wh + 1, :] = pooled.astype(pad1_ref.dtype)

    # ---- conv1 (3x3, pad=1, no bias) + BN1 + ReLU ---------------------------
    acc1 = _conv3x3(pad1_ref, w1_ref, Hh, Wh, Cmid)    # (Hh*Wh, Cmid) f32
    h1 = jnp.maximum(acc1 * s1_ref[...] + b1_ref[...], 0.0)
    pad2_ref[1:Hh + 1, 1:Wh + 1, :] = h1.reshape(Hh, Wh, Cmid).astype(pad2_ref.dtype)

    # ---- conv2 (3x3, pad=1, no bias) + BN2 + ReLU ---------------------------
    acc2 = _conv3x3(pad2_ref, w2_ref, Hh, Wh, Cout)    # (Hh*Wh, Cout) f32
    y = jnp.maximum(acc2 * s2_ref[...] + b2_ref[...], 0.0)
    o_ref[0] = y.reshape(Hh, Wh, Cout).astype(o_ref.dtype)


def down_pallas(x_nchw, w1, w2, s1, b1, s2, b2):
    """x_nchw: (N, Cin, H, W) float32 (PyTorch layout). Returns (N, Cout, H//2, W//2)."""
    N, Cin, H, W = x_nchw.shape
    Cmid = w1.shape[-1]
    Cout = w2.shape[-1]
    assert H % 2 == 0 and W % 2 == 0, "MaxPool2d(2) path assumes even H and W"
    Hh, Wh = H // 2, W // 2

    # NCHW -> NHWC (module API is NCHW), cast to bf16 (halves input HBM traffic,
    # enables bf16 MXU).  The second reshape is a free contiguous view that exposes
    # the 2x2 pooling window as (row-parity major dim, column-parity lane half).
    # TODO(synk): fold the boundary NCHW<->NHWC transposes into producer/consumer ops.
    x = jnp.transpose(x_nchw, (0, 2, 3, 1)).astype(jnp.bfloat16)
    x = x.reshape(N, Hh, 2, Wh, 2 * Cin)
    w1b = w1.astype(jnp.bfloat16)
    w2b = w2.astype(jnp.bfloat16)

    out_nhwc = pl.pallas_call(
        down_kernel,
        out_shape=jax.ShapeDtypeStruct((N, Hh, Wh, Cout), jnp.float32),
        grid_spec=pltpu.PrefetchScalarGridSpec(
            num_scalar_prefetch=0,
            grid=(N,),                                 # one image per grid step
            in_specs=[
                pl.BlockSpec((1, Hh, 2, Wh, 2 * Cin), lambda n: (n, 0, 0, 0, 0)),
                pl.BlockSpec((3, 3, Cin, Cmid), lambda n: (0, 0, 0, 0)),
                pl.BlockSpec((3, 3, Cmid, Cout), lambda n: (0, 0, 0, 0)),
                pl.BlockSpec((1, Cmid), lambda n: (0, 0)),
                pl.BlockSpec((1, Cmid), lambda n: (0, 0)),
                pl.BlockSpec((1, Cout), lambda n: (0, 0)),
                pl.BlockSpec((1, Cout), lambda n: (0, 0)),
            ],
            out_specs=pl.BlockSpec((1, Hh, Wh, Cout), lambda n: (n, 0, 0, 0)),
            scratch_shapes=[
                pltpu.VMEM((Hh + 2, Wh + 2, Cin), jnp.float32),
                pltpu.VMEM((Hh + 2, Wh + 2, Cmid), jnp.float32),
            ],
        ),
        compiler_params=pltpu.CompilerParams(
            dimension_semantics=("parallel",)),        # batch is independent (2 TCs on v7x)
    )(x, w1b, w2b, s1, b1, s2, b2)

    return jnp.transpose(out_nhwc, (0, 3, 1, 2))       # NHWC -> NCHW


def down_ref(x_nchw, w1, w2, s1, b1, s2, b2):
    """Pure-JAX f32 reference (same eval-mode folded-BN semantics)."""
    x = jnp.transpose(x_nchw, (0, 2, 3, 1))            # NHWC
    p = lax.reduce_window(x, -jnp.inf, lax.max, (1, 2, 2, 1), (1, 2, 2, 1), "VALID")

    def conv(h, w):
        return lax.conv_general_dilated(h, w, (1, 1), ((1, 1), (1, 1)),
                                        dimension_numbers=("NHWC", "HWIO", "NHWC"))

    h1 = jnp.maximum(conv(p, w1) * s1 + b1, 0.0)
    h2 = jnp.maximum(conv(h1, w2) * s2 + b2, 0.0)
    return jnp.transpose(h2, (0, 3, 1, 2))             # NCHW


if __name__ == "__main__":
    N, Cin, H, W = 2, 4, 16, 16
    Cout = 8
    Cmid = Cout
    eps = 1e-5

    key = jax.random.PRNGKey(0)
    ks = jax.random.split(key, 12)

    x = jax.random.normal(ks[0], (N, Cin, H, W), jnp.float32)

    # Conv weights in HWIO layout (kh, kw, in, out), deterministic init.
    w1 = 0.1 * jax.random.normal(ks[1], (3, 3, Cin, Cmid), jnp.float32)
    w2 = 0.1 * jax.random.normal(ks[2], (3, 3, Cmid, Cout), jnp.float32)

    # BatchNorm params (gamma, beta, running_mean, running_var), folded to scale/shift.
    g1 = 1.0 + 0.1 * jax.random.normal(ks[3], (Cmid,), jnp.float32)
    be1 = 0.05 * jax.random.normal(ks[4], (Cmid,), jnp.float32)
    m1 = 0.1 * jax.random.normal(ks[5], (Cmid,), jnp.float32)
    v1 = 0.5 + jax.random.uniform(ks[6], (Cmid,), jnp.float32)
    g2 = 1.0 + 0.1 * jax.random.normal(ks[7], (Cout,), jnp.float32)
    be2 = 0.05 * jax.random.normal(ks[8], (Cout,), jnp.float32)
    m2 = 0.1 * jax.random.normal(ks[9], (Cout,), jnp.float32)
    v2 = 0.5 + jax.random.uniform(ks[10], (Cout,), jnp.float32)

    s1 = (g1 / jnp.sqrt(v1 + eps)).reshape(1, Cmid)
    b1 = (be1 - m1 * g1 / jnp.sqrt(v1 + eps)).reshape(1, Cmid)
    s2 = (g2 / jnp.sqrt(v2 + eps)).reshape(1, Cout)
    b2 = (be2 - m2 * g2 / jnp.sqrt(v2 + eps)).reshape(1, Cout)

    y = jax.jit(down_pallas)(x, w1, w2, s1, b1, s2, b2)
    jax.block_until_ready(y)

    y_ref = down_ref(x, w1, w2, s1, b1, s2, b2)

    assert y.shape == (N, Cout, H // 2, W // 2), y.shape
    assert bool(jnp.all(jnp.isfinite(y)))
    assert bool(jnp.allclose(y, y_ref, atol=5e-2, rtol=5e-2)), float(jnp.max(jnp.abs(y - y_ref)))

    print("KERNEL_OK")
</pallas_src>

<mosaic_0001>
module attributes {stable_mosaic.version = 11 : i64} {
  func.func @down_kernel(%arg0: i32, %arg1: memref<1x8x2x8x8xbf16, #tpu.memory_space<vmem>>, %arg2: memref<3x3x4x8xbf16, #tpu.memory_space<vmem>>, %arg3: memref<3x3x8x8xbf16, #tpu.memory_space<vmem>>, %arg4: memref<1x8xf32, #tpu.memory_space<vmem>>, %arg5: memref<1x8xf32, #tpu.memory_space<vmem>>, %arg6: memref<1x8xf32, #tpu.memory_space<vmem>>, %arg7: memref<1x8xf32, #tpu.memory_space<vmem>>, %arg8: memref<1x8x8x8xf32, #tpu.memory_space<vmem>>, %arg9: memref<10x10x4xf32, #tpu.memory_space<vmem>>, %arg10: memref<10x10x8xf32, #tpu.memory_space<vmem>>) attributes {dimension_semantics = [#tpu.dimension_semantics<parallel>], iteration_bounds = array<i64: 2>, scalar_prefetch = 0 : i64, scratch_operands = 2 : i64, tpu.core_type = #tpu.core_type<tc>, window_params = [{transform_indices = @transform_0, window_bounds = array<i64: 1, 8, 2, 8, 8>}, {pipeline_mode = #tpu.pipeline_mode<synchronous>, transform_indices = @transform_1, window_bounds = array<i64: 3, 3, 4, 8>}, {pipeline_mode = #tpu.pipeline_mode<synchronous>, transform_indices = @transform_2, window_bounds = array<i64: 3, 3, 8, 8>}, {pipeline_mode = #tpu.pipeline_mode<synchronous>, transform_indices = @transform_3, window_bounds = array<i64: 1, 8>}, {pipeline_mode = #tpu.pipeline_mode<synchronous>, transform_indices = @transform_4, window_bounds = array<i64: 1, 8>}, {pipeline_mode = #tpu.pipeline_mode<synchronous>, transform_indices = @transform_5, window_bounds = array<i64: 1, 8>}, {pipeline_mode = #tpu.pipeline_mode<synchronous>, transform_indices = @transform_6, window_bounds = array<i64: 1, 8>}, {transform_indices = @transform_7, window_bounds = array<i64: 1, 8, 8, 8>}]} {
    %cst = arith.constant 0.000000e+00 : f32
    %0 = vector.broadcast %cst : f32 to vector<1x10x4xf32>
    %c0 = arith.constant 0 : index
    %c0_0 = arith.constant 0 : index
    %c0_1 = arith.constant 0 : index
    %1 = vector.load %arg9[%c0, %c0_0, %c0_1] : memref<10x10x4xf32, #tpu.memory_space<vmem>>, vector<1x10x4xf32>
    tpu.vector_store %arg9[%c0, %c0_0, %c0_1], %0 {strides = array<i32>} : memref<10x10x4xf32, #tpu.memory_space<vmem>>, vector<1x10x4xf32>,
    %cst_2 = arith.constant 0.000000e+00 : f32
    %2 = vector.broadcast %cst_2 : f32 to vector<1x10x4xf32>
    %c9 = arith.constant 9 : index
    %c0_3 = arith.constant 0 : index
    %c0_4 = arith.constant 0 : index
    %3 = vector.load %arg9[%c9, %c0_3, %c0_4] : memref<10x10x4xf32, #tpu.memory_space<vmem>>, vector<1x10x4xf32>
    tpu.vector_store %arg9[%c9, %c0_3, %c0_4], %2 {strides = array<i32>} : memref<10x10x4xf32, #tpu.memory_space<vmem>>, vector<1x10x4xf32>,
    %cst_5 = arith.constant 0.000000e+00 : f32
    %4 = vector.broadcast %cst_5 : f32 to vector<10x1x4xf32>
    %c0_6 = arith.constant 0 : index
    %c0_7 = arith.constant 0 : index
    %c0_8 = arith.constant 0 : index
    %5 = vector.load %arg9[%c0_6, %c0_7, %c0_8] : memref<10x10x4xf32, #tpu.memory_space<vmem>>, vector<10x1x4xf32>
    tpu.vector_store %arg9[%c0_6, %c0_7, %c0_8], %4 {strides = array<i32>} : memref<10x10x4xf32, #tpu.memory_space<vmem>>, vector<10x1x4xf32>,
    %cst_9 = arith.constant 0.000000e+00 : f32
    %6 = vector.broadcast %cst_9 : f32 to vector<10x1x4xf32>
    %c0_10 = arith.constant 0 : index
    %c9_11 = arith.constant 9 : index
    %c0_12 = arith.constant 0 : index
    %7 = vector.load %arg9[%c0_10, %c9_11, %c0_12] : memref<10x10x4xf32, #tpu.memory_space<vmem>>, vector<10x1x4xf32>
    tpu.vector_store %arg9[%c0_10, %c9_11, %c0_12], %6 {strides = array<i32>} : memref<10x10x4xf32, #tpu.memory_space<vmem>>, vector<10x1x4xf32>,
    %cst_13 = arith.constant 0.000000e+00 : f32
    %8 = vector.broadcast %cst_13 : f32 to vector<1x10x8xf32>
    %c0_14 = arith.constant 0 : index
    %c0_15 = arith.constant 0 : index
    %c0_16 = arith.constant 0 : index
    %9 = vector.load %arg10[%c0_14, %c0_15, %c0_16] : memref<10x10x8xf32, #tpu.memory_space<vmem>>, vector<1x10x8xf32>
    tpu.vector_store %arg10[%c0_14, %c0_15, %c0_16], %8 {strides = array<i32>} : memref<10x10x8xf32, #tpu.memory_space<vmem>>, vector<1x10x8xf32>,
    %cst_17 = arith.constant 0.000000e+00 : f32
    %10 = vector.broadcast %cst_17 : f32 to vector<1x10x8xf32>
    %c9_18 = arith.constant 9 : index
    %c0_19 = arith.constant 0 : index
    %c0_20 = arith.constant 0 : index
    %11 = vector.load %arg10[%c9_18, %c0_19, %c0_20] : memref<10x10x8xf32, #tpu.memory_space<vmem>>, vector<1x10x8xf32>
    tpu.vector_store %arg10[%c9_18, %c0_19, %c0_20], %10 {strides = array<i32>} : memref<10x10x8xf32, #tpu.memory_space<vmem>>, vector<1x10x8xf32>,
    %cst_21 = arith.constant 0.000000e+00 : f32
    %12 = vector.broadcast %cst_21 : f32 to vector<10x1x8xf32>
    %c0_22 = arith.constant 0 : index
    %c0_23 = arith.constant 0 : index
    %c0_24 = arith.constant 0 : index
    %13 = vector.load %arg10[%c0_22, %c0_23, %c0_24] : memref<10x10x8xf32, #tpu.memory_space<vmem>>, vector<10x1x8xf32>
    tpu.vector_store %arg10[%c0_22, %c0_23, %c0_24], %12 {strides = array<i32>} : memref<10x10x8xf32, #tpu.memory_space<vmem>>, vector<10x1x8xf32>,
    %cst_25 = arith.constant 0.000000e+00 : f32
    %14 = vector.broadcast %cst_25 : f32 to vector<10x1x8xf32>
    %c0_26 = arith.constant 0 : index
    %c9_27 = arith.constant 9 : index
    %c0_28 = arith.constant 0 : index
    %15 = vector.load %arg10[%c0_26, %c9_27, %c0_28] : memref<10x10x8xf32, #tpu.memory_space<vmem>>, vector<10x1x8xf32>
    tpu.vector_store %arg10[%c0_26, %c9_27, %c0_28], %14 {strides = array<i32>} : memref<10x10x8xf32, #tpu.memory_space<vmem>>, vector<10x1x8xf32>,
    %c0_29 = arith.constant 0 : index
    %c0_30 = arith.constant 0 : index
    %c0_31 = arith.constant 0 : index
    %c0_32 = arith.constant 0 : index
    %c0_33 = arith.constant 0 : index
    %16 = vector.load %arg1[%c0_29, %c0_30, %c0_31, %c0_32, %c0_33] : memref<1x8x2x8x8xbf16, #tpu.memory_space<vmem>>, vector<1x8x2x8x8xbf16>
    %17 = vector.shape_cast %16 : vector<1x8x2x8x8xbf16> to vector<8x2x8x8xbf16>
    %18 = vector.extract_strided_slice %17 {offsets = [0, 0, 0, 0], sizes = [8, 1, 8, 8], strides = [1, 1, 1, 1]} : vector<8x2x8x8xbf16> to vector<8x1x8x8xbf16>
    %19 = vector.shape_cast %18 : vector<8x1x8x8xbf16> to vector<8x8x8xbf16>
    %20 = vector.extract_strided_slice %17 {offsets = [0, 1, 0, 0], sizes = [8, 1, 8, 8], strides = [1, 1, 1, 1]} : vector<8x2x8x8xbf16> to vector<8x1x8x8xbf16>
    %21 = vector.shape_cast %20 : vector<8x1x8x8xbf16> to vector<8x8x8xbf16>
    %22 = arith.maximumf %19, %21 : vector<8x8x8xbf16>
    %23 = vector.extract_strided_slice %22 {offsets = [0, 0, 0], sizes = [8, 8, 4], strides = [1, 1, 1]} : vector<8x8x8xbf16> to vector<8x8x4xbf16>
    %24 = vector.extract_strided_slice %22 {offsets = [0, 0, 4], sizes = [8, 8, 4], strides = [1, 1, 1]} : vector<8x8x8xbf16> to vector<8x8x4xbf16>
    %25 = arith.maximumf %23, %24 : vector<8x8x4xbf16>
    %26 = arith.extf %25 : vector<8x8x4xbf16> to vector<8x8x4xf32>
    %c1 = arith.constant 1 : index
    %c1_34 = arith.constant 1 : index
    %c0_35 = arith.constant 0 : index
    %27 = vector.load %arg9[%c1, %c1_34, %c0_35] : memref<10x10x4xf32, #tpu.memory_space<vmem>>, vector<8x8x4xf32>
    tpu.vector_store %arg9[%c1, %c1_34, %c0_35], %26 {strides = array<i32>} : memref<10x10x4xf32, #tpu.memory_space<vmem>>, vector<8x8x4xf32>,
    %c0_36 = arith.constant 0 : index
    %c0_37 = arith.constant 0 : index
    %c0_38 = arith.constant 0 : index
    %28 = vector.load %arg9[%c0_36, %c0_37, %c0_38] : memref<10x10x4xf32, #tpu.memory_space<vmem>>, vector<10x10x4xf32>
    %cst_39 = arith.constant 0.000000e+00 : f32
    %29 = vector.broadcast %cst_39 : f32 to vector<64x8xf32>
    %30 = vector.extract_strided_slice %28 {offsets = [0, 0, 0], sizes = [8, 8, 4], strides = [1, 1, 1]} : vector<10x10x4xf32> to vector<8x8x4xf32>
    %31 = vector.shape_cast %30 : vector<8x8x4xf32> to vector<64x4xf32>
    %32 = arith.truncf %31 : vector<64x4xf32> to vector<64x4xbf16>
    %c0_40 = arith.constant 0 : index
    %c0_41 = arith.constant 0 : index
    %c0_42 = arith.constant 0 : index
    %c0_43 = arith.constant 0 : index
    %33 = vector.load %arg2[%c0_40, %c0_41, %c0_42, %c0_43] : memref<3x3x4x8xbf16, #tpu.memory_space<vmem>>, vector<1x1x4x8xbf16>
    %34 = vector.shape_cast %33 : vector<1x1x4x8xbf16> to vector<4x8xbf16>
    %cst_44 = arith.constant dense<0.000000e+00> : vector<64x8xf32>
    %35 = tpu.matmul %32, %34, %cst_44 {dimension_numbers = #tpu.dot_dimension_numbers<[1], [0], [0], [1], [0, 0, 1, 1], [], []>} : vector<64x4xbf16>, vector<4x8xbf16>, vector<64x8xf32> -> vector<64x8xf32>
    %36 = arith.addf %29, %35 : vector<64x8xf32>
    %37 = vector.extract_strided_slice %28 {offsets = [0, 1, 0], sizes = [8, 8, 4], strides = [1, 1, 1]} : vector<10x10x4xf32> to vector<8x8x4xf32>
    %38 = vector.shape_cast %37 : vector<8x8x4xf32> to vector<64x4xf32>
    %39 = arith.truncf %38 : vector<64x4xf32> to vector<64x4xbf16>
    %c0_45 = arith.constant 0 : index
    %c1_46 = arith.constant 1 : index
    %c0_47 = arith.constant 0 : index
    %c0_48 = arith.constant 0 : index
    %40 = vector.load %arg2[%c0_45, %c1_46, %c0_47, %c0_48] : memref<3x3x4x8xbf16, #tpu.memory_space<vmem>>, vector<1x1x4x8xbf16>
    %41 = vector.shape_cast %40 : vector<1x1x4x8xbf16> to vector<4x8xbf16>
    %cst_49 = arith.constant dense<0.000000e+00> : vector<64x8xf32>
    %42 = tpu.matmul %39, %41, %cst_49 {dimension_numbers = #tpu.dot_dimension_numbers<[1], [0], [0], [1], [0, 0, 1, 1], [], []>} : vector<64x4xbf16>, vector<4x8xbf16>, vector<64x8xf32> -> vector<64x8xf32>
    %43 = arith.addf %36, %42 : vector<64x8xf32>
    %44 = vector.extract_strided_slice %28 {offsets = [0, 2, 0], sizes = [8, 8, 4], strides = [1, 1, 1]} : vector<10x10x4xf32> to vector<8x8x4xf32>
    %45 = vector.shape_cast %44 : vector<8x8x4xf32> to vector<64x4xf32>
    %46 = arith.truncf %45 : vector<64x4xf32> to vector<64x4xbf16>
    %c0_50 = arith.constant 0 : index
    %c2 = arith.constant 2 : index
    %c0_51 = arith.constant 0 : index
    %c0_52 = arith.constant 0 : index
    %47 = vector.load %arg2[%c0_50, %c2, %c0_51, %c0_52] : memref<3x3x4x8xbf16, #tpu.memory_space<vmem>>, vector<1x1x4x8xbf16>
    %48 = vector.shape_cast %47 : vector<1x1x4x8xbf16> to vector<4x8xbf16>
    %cst_53 = arith.constant dense<0.000000e+00> : vector<64x8xf32>
    %49 = tpu.matmul %46, %48, %cst_53 {dimension_numbers = #tpu.dot_dimension_numbers<[1], [0], [0], [1], [0, 0, 1, 1], [], []>} : vector<64x4xbf16>, vector<4x8xbf16>, vector<64x8xf32> -> vector<64x8xf32>
    %50 = arith.addf %43, %49 : vector<64x8xf32>
    %51 = vector.extract_strided_slice %28 {offsets = [1, 0, 0], sizes = [8, 8, 4], strides = [1, 1, 1]} : vector<10x10x4xf32> to vector<8x8x4xf32>
    %52 = vector.shape_cast %51 : vector<8x8x4xf32> to vector<64x4xf32>
    %53 = arith.truncf %52 : vector<64x4xf32> to vector<64x4xbf16>
    %c1_54 = arith.constant 1 : index
    %c0_55 = arith.constant 0 : index
    %c0_56 = arith.constant 0 : index
    %c0_57 = arith.constant 0 : index
    %54 = vector.load %arg2[%c1_54, %c0_55, %c0_56, %c0_57] : memref<3x3x4x8xbf16, #tpu.memory_space<vmem>>, vector<1x1x4x8xbf16>
    %55 = vector.shape_cast %54 : vector<1x1x4x8xbf16> to vector<4x8xbf16>
    %cst_58 = arith.constant dense<0.000000e+00> : vector<64x8xf32>
    %56 = tpu.matmul %53, %55, %cst_58 {dimension_numbers = #tpu.dot_dimension_numbers<[1], [0], [0], [1], [0, 0, 1, 1], [], []>} : vector<64x4xbf16>, vector<4x8xbf16>, vector<64x8xf32> -> vector<64x8xf32>
    %57 = arith.addf %50, %56 : vector<64x8xf32>
    %58 = vector.extract_strided_slice %28 {offsets = [1, 1, 0], sizes = [8, 8, 4], strides = [1, 1, 1]} : vector<10x10x4xf32> to vector<8x8x4xf32>
    %59 = vector.shape_cast %58 : vector<8x8x4xf32> to vector<64x4xf32>
    %60 = arith.truncf %59 : vector<64x4xf32> to vector<64x4xbf16>
    %c1_59 = arith.constant 1 : index
    %c1_60 = arith.constant 1 : index
    %c0_61 = arith.constant 0 : index
    %c0_62 = arith.constant 0 : index
    %61 = vector.load %arg2[%c1_59, %c1_60, %c0_61, %c0_62] : memref<3x3x4x8xbf16, #tpu.memory_space<vmem>>, vector<1x1x4x8xbf16>
    %62 = vector.shape_cast %61 : vector<1x1x4x8xbf16> to vector<4x8xbf16>
    %cst_63 = arith.constant dense<0.000000e+00> : vector<64x8xf32>
    %63 = tpu.matmul %60, %62, %cst_63 {dimension_numbers = #tpu.dot_dimension_numbers<[1], [0], [0], [1], [0, 0, 1, 1], [], []>} : vector<64x4xbf16>, vector<4x8xbf16>, vector<64x8xf32> -> vector<64x8xf32>
    %64 = arith.addf %57, %63 : vector<64x8xf32>
    %65 = vector.extract_strided_slice %28 {offsets = [1, 2, 0], sizes = [8, 8, 4], strides = [1, 1, 1]} : vector<10x10x4xf32> to vector<8x8x4xf32>
    %66 = vector.shape_cast %65 : vector<8x8x4xf32> to vector<64x4xf32>
    %67 = arith.truncf %66 : vector<64x4xf32> to vector<64x4xbf16>
    %c1_64 = arith.constant 1 : index
    %c2_65 = arith.constant 2 : index
    %c0_66 = arith.constant 0 : index
    %c0_67 = arith.constant 0 : index
    %68 = vector.load %arg2[%c1_64, %c2_65, %c0_66, %c0_67] : memref<3x3x4x8xbf16, #tpu.memory_space<vmem>>, vector<1x1x4x8xbf16>
    %69 = vector.shape_cast %68 : vector<1x1x4x8xbf16> to vector<4x8xbf16>
    %cst_68 = arith.constant dense<0.000000e+00> : vector<64x8xf32>
    %70 = tpu.matmul %67, %69, %cst_68 {dimension_numbers = #tpu.dot_dimension_numbers<[1], [0], [0], [1], [0, 0, 1, 1], [], []>} : vector<64x4xbf16>, vector<4x8xbf16>, vector<64x8xf32> -> vector<64x8xf32>
    %71 = arith.addf %64, %70 : vector<64x8xf32>
    %72 = vector.extract_strided_slice %28 {offsets = [2, 0, 0], sizes = [8, 8, 4], strides = [1, 1, 1]} : vector<10x10x4xf32> to vector<8x8x4xf32>
    %73 = vector.shape_cast %72 : vector<8x8x4xf32> to vector<64x4xf32>
    %74 = arith.truncf %73 : vector<64x4xf32> to vector<64x4xbf16>
    %c2_69 = arith.constant 2 : index
    %c0_70 = arith.constant 0 : index
    %c0_71 = arith.constant 0 : index
    %c0_72 = arith.constant 0 : index
    %75 = vector.load %arg2[%c2_69, %c0_70, %c0_71, %c0_72] : memref<3x3x4x8xbf16, #tpu.memory_space<vmem>>, vector<1x1x4x8xbf16>
    %76 = vector.shape_cast %75 : vector<1x1x4x8xbf16> to vector<4x8xbf16>
    %cst_73 = arith.constant dense<0.000000e+00> : vector<64x8xf32>
    %77 = tpu.matmul %74, %76, %cst_73 {dimension_numbers = #tpu.dot_dimension_numbers<[1], [0], [0], [1], [0, 0, 1, 1], [], []>} : vector<64x4xbf16>, vector<4x8xbf16>, vector<64x8xf32> -> vector<64x8xf32>
    %78 = arith.addf %71, %77 : vector<64x8xf32>
    %79 = vector.extract_strided_slice %28 {offsets = [2, 1, 0], sizes = [8, 8, 4], strides = [1, 1, 1]} : vector<10x10x4xf32> to vector<8x8x4xf32>
    %80 = vector.shape_cast %79 : vector<8x8x4xf32> to vector<64x4xf32>
    %81 = arith.truncf %80 : vector<64x4xf32> to vector<64x4xbf16>
    %c2_74 = arith.constant 2 : index
    %c1_75 = arith.constant 1 : index
    %c0_76 = arith.constant 0 : index
    %c0_77 = arith.constant 0 : index
    %82 = vector.load %arg2[%c2_74, %c1_75, %c0_76, %c0_77] : memref<3x3x4x8xbf16, #tpu.memory_space<vmem>>, vector<1x1x4x8xbf16>
    %83 = vector.shape_cast %82 : vector<1x1x4x8xbf16> to vector<4x8xbf16>
    %cst_78 = arith.constant dense<0.000000e+00> : vector<64x8xf32>
    %84 = tpu.matmul %81, %83, %cst_78 {dimension_numbers = #tpu.dot_dimension_numbers<[1], [0], [0], [1], [0, 0, 1, 1], [], []>} : vector<64x4xbf16>, vector<4x8xbf16>, vector<64x8xf32> -> vector<64x8xf32>
    %85 = arith.addf %78, %84 : vector<64x8xf32>
    %86 = vector.extract_strided_slice %28 {offsets = [2, 2, 0], sizes = [8, 8, 4], strides = [1, 1, 1]} : vector<10x10x4xf32> to vector<8x8x4xf32>
    %87 = vector.shape_cast %86 : vector<8x8x4xf32> to vector<64x4xf32>
    %88 = arith.truncf %87 : vector<64x4xf32> to vector<64x4xbf16>
    %c2_79 = arith.constant 2 : index
    %c2_80 = arith.constant 2 : index
    %c0_81 = arith.constant 0 : index
    %c0_82 = arith.constant 0 : index
    %89 = vector.load %arg2[%c2_79, %c2_80, %c0_81, %c0_82] : memref<3x3x4x8xbf16, #tpu.memory_space<vmem>>, vector<1x1x4x8xbf16>
    %90 = vector.shape_cast %89 : vector<1x1x4x8xbf16> to vector<4x8xbf16>
    %cst_83 = arith.constant dense<0.000000e+00> : vector<64x8xf32>
    %91 = tpu.matmul %88, %90, %cst_83 {dimension_numbers = #tpu.dot_dimension_numbers<[1], [0], [0], [1], [0, 0, 1, 1], [], []>} : vector<64x4xbf16>, vector<4x8xbf16>, vector<64x8xf32> -> vector<64x8xf32>
    %92 = arith.addf %85, %91 : vector<64x8xf32>
    %c0_84 = arith.constant 0 : index
    %c0_85 = arith.constant 0 : index
    %93 = vector.load %arg4[%c0_84, %c0_85] : memref<1x8xf32, #tpu.memory_space<vmem>>, vector<1x8xf32>
    %94 = vector.broadcast %93 : vector<1x8xf32> to vector<64x8xf32>
    %95 = arith.mulf %92, %94 : vector<64x8xf32>
    %c0_86 = arith.constant 0 : index
    %c0_87 = arith.constant 0 : index
    %96 = vector.load %arg5[%c0_86, %c0_87] : memref<1x8xf32, #tpu.memory_space<vmem>>, vector<1x8xf32>
    %97 = vector.broadcast %96 : vector<1x8xf32> to vector<64x8xf32>
    %98 = arith.addf %95, %97 : vector<64x8xf32>
    %cst_88 = arith.constant 0.000000e+00 : f32
    %99 = vector.broadcast %cst_88 : f32 to vector<64x8xf32>
    %100 = arith.maximumf %98, %99 : vector<64x8xf32>
    %101 = vector.shape_cast %100 : vector<64x8xf32> to vector<8x8x8xf32>
    %c1_89 = arith.constant 1 : index
    %c1_90 = arith.constant 1 : index
    %c0_91 = arith.constant 0 : index
    %102 = vector.load %arg10[%c1_89, %c1_90, %c0_91] : memref<10x10x8xf32, #tpu.memory_space<vmem>>, vector<8x8x8xf32>
    tpu.vector_store %arg10[%c1_89, %c1_90, %c0_91], %101 {strides = array<i32>} : memref<10x10x8xf32, #tpu.memory_space<vmem>>, vector<8x8x8xf32>,
    %c0_92 = arith.constant 0 : index
    %c0_93 = arith.constant 0 : index
    %c0_94 = arith.constant 0 : index
    %103 = vector.load %arg10[%c0_92, %c0_93, %c0_94] : memref<10x10x8xf32, #tpu.memory_space<vmem>>, vector<10x10x8xf32>
    %cst_95 = arith.constant 0.000000e+00 : f32
    %104 = vector.broadcast %cst_95 : f32 to vector<64x8xf32>
    %105 = vector.extract_strided_slice %103 {offsets = [0, 0, 0], sizes = [8, 8, 8], strides = [1, 1, 1]} : vector<10x10x8xf32> to vector<8x8x8xf32>
    %106 = vector.shape_cast %105 : vector<8x8x8xf32> to vector<64x8xf32>
    %107 = arith.truncf %106 : vector<64x8xf32> to vector<64x8xbf16>
    %c0_96 = arith.constant 0 : index
    %c0_97 = arith.constant 0 : index
    %c0_98 = arith.constant 0 : index
    %c0_99 = arith.constant 0 : index
    %108 = vector.load %arg3[%c0_96, %c0_97, %c0_98, %c0_99] : memref<3x3x8x8xbf16, #tpu.memory_space<vmem>>, vector<1x1x8x8xbf16>
    %109 = vector.shape_cast %108 : vector<1x1x8x8xbf16> to vector<8x8xbf16>
    %cst_100 = arith.constant dense<0.000000e+00> : vector<64x8xf32>
    %110 = tpu.matmul %107, %109, %cst_100 {dimension_numbers = #tpu.dot_dimension_numbers<[1], [0], [0], [1], [0, 0, 1, 1], [], []>} : vector<64x8xbf16>, vector<8x8xbf16>, vector<64x8xf32> -> vector<64x8xf32>
    %111 = arith.addf %104, %110 : vector<64x8xf32>
    %112 = vector.extract_strided_slice %103 {offsets = [0, 1, 0], sizes = [8, 8, 8], strides = [1, 1, 1]} : vector<10x10x8xf32> to vector<8x8x8xf32>
    %113 = vector.shape_cast %112 : vector<8x8x8xf32> to vector<64x8xf32>
    %114 = arith.truncf %113 : vector<64x8xf32> to vector<64x8xbf16>
    %c0_101 = arith.constant 0 : index
    %c1_102 = arith.constant 1 : index
    %c0_103 = arith.constant 0 : index
    %c0_104 = arith.constant 0 : index
    %115 = vector.load %arg3[%c0_101, %c1_102, %c0_103, %c0_104] : memref<3x3x8x8xbf16, #tpu.memory_space<vmem>>, vector<1x1x8x8xbf16>
    %116 = vector.shape_cast %115 : vector<1x1x8x8xbf16> to vector<8x8xbf16>
    %cst_105 = arith.constant dense<0.000000e+00> : vector<64x8xf32>
    %117 = tpu.matmul %114, %116, %cst_105 {dimension_numbers = #tpu.dot_dimension_numbers<[1], [0], [0], [1], [0, 0, 1, 1], [], []>} : vector<64x8xbf16>, vector<8x8xbf16>, vector<64x8xf32> -> vector<64x8xf32>
    %118 = arith.addf %111, %117 : vector<64x8xf32>
    %119 = vector.extract_strided_slice %103 {offsets = [0, 2, 0], sizes = [8, 8, 8], strides = [1, 1, 1]} : vector<10x10x8xf32> to vector<8x8x8xf32>
    %120 = vector.shape_cast %119 : vector<8x8x8xf32> to vector<64x8xf32>
    %121 = arith.truncf %120 : vector<64x8xf32> to vector<64x8xbf16>
    %c0_106 = arith.constant 0 : index
    %c2_107 = arith.constant 2 : index
    %c0_108 = arith.constant 0 : index
    %c0_109 = arith.constant 0 : index
    %122 = vector.load %arg3[%c0_106, %c2_107, %c0_108, %c0_109] : memref<3x3x8x8xbf16, #tpu.memory_space<vmem>>, vector<1x1x8x8xbf16>
    %123 = vector.shape_cast %122 : vector<1x1x8x8xbf16> to vector<8x8xbf16>
    %cst_110 = arith.constant dense<0.000000e+00> : vector<64x8xf32>
    %124 = tpu.matmul %121, %123, %cst_110 {dimension_numbers = #tpu.dot_dimension_numbers<[1], [0], [0], [1], [0, 0, 1, 1], [], []>} : vector<64x8xbf16>, vector<8x8xbf16>, vector<64x8xf32> -> vector<64x8xf32>
    %125 = arith.addf %118, %124 : vector<64x8xf32>
    %126 = vector.extract_strided_slice %103 {offsets = [1, 0, 0], sizes = [8, 8, 8], strides = [1, 1, 1]} : vector<10x10x8xf32> to vector<8x8x8xf32>
    %127 = vector.shape_cast %126 : vector<8x8x8xf32> to vector<64x8xf32>
    %128 = arith.truncf %127 : vector<64x8xf32> to vector<64x8xbf16>
    %c1_111 = arith.constant 1 : index
    %c0_112 = arith.constant 0 : index
    %c0_113 = arith.constant 0 : index
    %c0_114 = arith.constant 0 : index
    %129 = vector.load %arg3[%c1_111, %c0_112, %c0_113, %c0_114] : memref<3x3x8x8xbf16, #tpu.memory_space<vmem>>, vector<1x1x8x8xbf16>
    %130 = vector.shape_cast %129 : vector<1x1x8x8xbf16> to vector<8x8xbf16>
    %cst_115 = arith.constant dense<0.000000e+00> : vector<64x8xf32>
    %131 = tpu.matmul %128, %130, %cst_115 {dimension_numbers = #tpu.dot_dimension_numbers<[1], [0], [0], [1], [0, 0, 1, 1], [], []>} : vector<64x8xbf16>, vector<8x8xbf16>, vector<64x8xf32> -> vector<64x8xf32>
    %132 = arith.addf %125, %131 : vector<64x8xf32>
    %133 = vector.extract_strided_slice %103 {offsets = [1, 1, 0], sizes = [8, 8, 8], strides = [1, 1, 1]} : vector<10x10x8xf32> to vector<8x8x8xf32>
    %134 = vector.shape_cast %133 : vector<8x8x8xf32> to vector<64x8xf32>
    %135 = arith.truncf %134 : vector<64x8xf32> to vector<64x8xbf16>
    %c1_116 = arith.constant 1 : index
    %c1_117 = arith.constant 1 : index
    %c0_118 = arith.constant 0 : index
    %c0_119 = arith.constant 0 : index
    %136 = vector.load %arg3[%c1_116, %c1_117, %c0_118, %c0_119] : memref<3x3x8x8xbf16, #tpu.memory_space<vmem>>, vector<1x1x8x8xbf16>
    %137 = vector.shape_cast %136 : vector<1x1x8x8xbf16> to vector<8x8xbf16>
    %cst_120 = arith.constant dense<0.000000e+00> : vector<64x8xf32>
    %138 = tpu.matmul %135, %137, %cst_120 {dimension_numbers = #tpu.dot_dimension_numbers<[1], [0], [0], [1], [0, 0, 1, 1], [], []>} : vector<64x8xbf16>, vector<8x8xbf16>, vector<64x8xf32> -> vector<64x8xf32>
    %139 = arith.addf %132, %138 : vector<64x8xf32>
    %140 = vector.extract_strided_slice %103 {offsets = [1, 2, 0], sizes = [8, 8, 8], strides = [1, 1, 1]} : vector<10x10x8xf32> to vector<8x8x8xf32>
    %141 = vector.shape_cast %140 : vector<8x8x8xf32> to vector<64x8xf32>
    %142 = arith.truncf %141 : vector<64x8xf32> to vector<64x8xbf16>
    %c1_121 = arith.constant 1 : index
    %c2_122 = arith.constant 2 : index
    %c0_123 = arith.constant 0 : index
    %c0_124 = arith.constant 0 : index
    %143 = vector.load %arg3[%c1_121, %c2_122, %c0_123, %c0_124] : memref<3x3x8x8xbf16, #tpu.memory_space<vmem>>, vector<1x1x8x8xbf16>
    %144 = vector.shape_cast %143 : vector<1x1x8x8xbf16> to vector<8x8xbf16>
    %cst_125 = arith.constant dense<0.000000e+00> : vector<64x8xf32>
    %145 = tpu.matmul %142, %144, %cst_125 {dimension_numbers = #tpu.dot_dimension_numbers<[1], [0], [0], [1], [0, 0, 1, 1], [], []>} : vector<64x8xbf16>, vector<8x8xbf16>, vector<64x8xf32> -> vector<64x8xf32>
    %146 = arith.addf %139, %145 : vector<64x8xf32>
    %147 = vector.extract_strided_slice %103 {offsets = [2, 0, 0], sizes = [8, 8, 8], strides = [1, 1, 1]} : vector<10x10x8xf32> to vector<8x8x8xf32>
    %148 = vector.shape_cast %147 : vector<8x8x8xf32> to vector<64x8xf32>
    %149 = arith.truncf %148 : vector<64x8xf32> to vector<64x8xbf16>
    %c2_126 = arith.constant 2 : index
    %c0_127 = arith.constant 0 : index
    %c0_128 = arith.constant 0 : index
    %c0_129 = arith.constant 0 : index
    %150 = vector.load %arg3[%c2_126, %c0_127, %c0_128, %c0_129] : memref<3x3x8x8xbf16, #tpu.memory_space<vmem>>, vector<1x1x8x8xbf16>
    %151 = vector.shape_cast %150 : vector<1x1x8x8xbf16> to vector<8x8xbf16>
    %cst_130 = arith.constant dense<0.000000e+00> : vector<64x8xf32>
    %152 = tpu.matmul %149, %151, %cst_130 {dimension_numbers = #tpu.dot_dimension_numbers<[1], [0], [0], [1], [0, 0, 1, 1], [], []>} : vector<64x8xbf16>, vector<8x8xbf16>, vector<64x8xf32> -> vector<64x8xf32>
    %153 = arith.addf %146, %152 : vector<64x8xf32>
    %154 = vector.extract_strided_slice %103 {offsets = [2, 1, 0], sizes = [8, 8, 8], strides = [1, 1, 1]} : vector<10x10x8xf32> to vector<8x8x8xf32>
    %155 = vector.shape_cast %154 : vector<8x8x8xf32> to vector<64x8xf32>
    %156 = arith.truncf %155 : vector<64x8xf32> to vector<64x8xbf16>
    %c2_131 = arith.constant 2 : index
    %c1_132 = arith.constant 1 : index
    %c0_133 = arith.constant 0 : index
    %c0_134 = arith.constant 0 : index
    %157 = vector.load %arg3[%c2_131, %c1_132, %c0_133, %c0_134] : memref<3x3x8x8xbf16, #tpu.memory_space<vmem>>, vector<1x1x8x8xbf16>
    %158 = vector.shape_cast %157 : vector<1x1x8x8xbf16> to vector<8x8xbf16>
    %cst_135 = arith.constant dense<0.000000e+00> : vector<64x8xf32>
    %159 = tpu.matmul %156, %158, %cst_135 {dimension_numbers = #tpu.dot_dimension_numbers<[1], [0], [0], [1], [0, 0, 1, 1], [], []>} : vector<64x8xbf16>, vector<8x8xbf16>, vector<64x8xf32> -> vector<64x8xf32>
    %160 = arith.addf %153, %159 : vector<64x8xf32>
    %161 = vector.extract_strided_slice %103 {offsets = [2, 2, 0], sizes = [8, 8, 8], strides = [1, 1, 1]} : vector<10x10x8xf32> to vector<8x8x8xf32>
    %162 = vector.shape_cast %161 : vector<8x8x8xf32> to vector<64x8xf32>
    %163 = arith.truncf %162 : vector<64x8xf32> to vector<64x8xbf16>
    %c2_136 = arith.constant 2 : index
    %c2_137 = arith.constant 2 : index
    %c0_138 = arith.constant 0 : index
    %c0_139 = arith.constant 0 : index
    %164 = vector.load %arg3[%c2_136, %c2_137, %c0_138, %c0_139] : memref<3x3x8x8xbf16, #tpu.memory_space<vmem>>, vector<1x1x8x8xbf16>
    %165 = vector.shape_cast %164 : vector<1x1x8x8xbf16> to vector<8x8xbf16>
    %cst_140 = arith.constant dense<0.000000e+00> : vector<64x8xf32>
    %166 = tpu.matmul %163, %165, %cst_140 {dimension_numbers = #tpu.dot_dimension_numbers<[1], [0], [0], [1], [0, 0, 1, 1], [], []>} : vector<64x8xbf16>, vector<8x8xbf16>, vector<64x8xf32> -> vector<64x8xf32>
    %167 = arith.addf %160, %166 : vector<64x8xf32>
    %c0_141 = arith.constant 0 : index
    %c0_142 = arith.constant 0 : index
    %168 = vector.load %arg6[%c0_141, %c0_142] : memref<1x8xf32, #tpu.memory_space<vmem>>, vector<1x8xf32>
    %169 = vector.broadcast %168 : vector<1x8xf32> to vector<64x8xf32>
    %170 = arith.mulf %167, %169 : vector<64x8xf32>
    %c0_143 = arith.constant 0 : index
    %c0_144 = arith.constant 0 : index
    %171 = vector.load %arg7[%c0_143, %c0_144] : memref<1x8xf32, #tpu.memory_space<vmem>>, vector<1x8xf32>
    %172 = vector.broadcast %171 : vector<1x8xf32> to vector<64x8xf32>
    %173 = arith.addf %170, %172 : vector<64x8xf32>
    %cst_145 = arith.constant 0.000000e+00 : f32
    %174 = vector.broadcast %cst_145 : f32 to vector<64x8xf32>
    %175 = arith.maximumf %173, %174 : vector<64x8xf32>
    %176 = vector.shape_cast %175 : vector<64x8xf32> to vector<8x8x8xf32>
    %c0_146 = arith.constant 0 : index
    %c0_147 = arith.constant 0 : index
    %c0_148 = arith.constant 0 : index
    %c0_149 = arith.constant 0 : index
    %177 = vector.load %arg8[%c0_146, %c0_147, %c0_148, %c0_149] : memref<1x8x8x8xf32, #tpu.memory_space<vmem>>, vector<1x8x8x8xf32>
    %178 = vector.shape_cast %177 : vector<1x8x8x8xf32> to vector<8x8x8xf32>
    %179 = vector.shape_cast %176 : vector<8x8x8xf32> to vector<1x8x8x8xf32>
    tpu.vector_store %arg8[%c0_146, %c0_147, %c0_148, %c0_149], %179 {strides = array<i32>} : memref<1x8x8x8xf32, #tpu.memory_space<vmem>>, vector<1x8x8x8xf32>,
    return
  }
  func.func @transform_0(%arg0: i32) -> (i32, i32, i32, i32, i32) {
    %c0_i32 = arith.constant 0 : i32
    %c0_i32_0 = arith.constant 0 : i32
    %c0_i32_1 = arith.constant 0 : i32
    %c0_i32_2 = arith.constant 0 : i32
    %c0_i32_3 = arith.constant 0 : i32
    return %arg0, %c0_i32, %c0_i32_0, %c0_i32_1, %c0_i32_2 : i32, i32, i32, i32, i32
  }
  func.func @transform_1(%arg0: i32) -> (i32, i32, i32, i32) {
    %c0_i32 = arith.constant 0 : i32
    %c0_i32_0 = arith.constant 0 : i32
    %c0_i32_1 = arith.constant 0 : i32
    %c0_i32_2 = arith.constant 0 : i32
    %c0_i32_3 = arith.constant 0 : i32
    return %c0_i32, %c0_i32_0, %c0_i32_1, %c0_i32_2 : i32, i32, i32, i32
  }
  func.func @transform_2(%arg0: i32) -> (i32, i32, i32, i32) {
    %c0_i32 = arith.constant 0 : i32
    %c0_i32_0 = arith.constant 0 : i32
    %c0_i32_1 = arith.constant 0 : i32
    %c0_i32_2 = arith.constant 0 : i32
    %c0_i32_3 = arith.constant 0 : i32
    return %c0_i32, %c0_i32_0, %c0_i32_1, %c0_i32_2 : i32, i32, i32, i32
  }
  func.func @transform_3(%arg0: i32) -> (i32, i32) {
    %c0_i32 = arith.constant 0 : i32
    %c0_i32_0 = arith.constant 0 : i32
    %c0_i32_1 = arith.constant 0 : i32
    return %c0_i32, %c0_i32_0 : i32, i32
  }
  func.func @transform_4(%arg0: i32) -> (i32, i32) {
    %c0_i32 = arith.constant 0 : i32
    %c0_i32_0 = arith.constant 0 : i32
    %c0_i32_1 = arith.constant 0 : i32
    return %c0_i32, %c0_i32_0 : i32, i32
  }
  func.func @transform_5(%arg0: i32) -> (i32, i32) {
    %c0_i32 = arith.constant 0 : i32
    %c0_i32_0 = arith.constant 0 : i32
    %c0_i32_1 = arith.constant 0 : i32
    return %c0_i32, %c0_i32_0 : i32, i32
  }
  func.func @transform_6(%arg0: i32) -> (i32, i32) {
    %c0_i32 = arith.constant 0 : i32
    %c0_i32_0 = arith.constant 0 : i32
    %c0_i32_1 = arith.constant 0 : i32
    return %c0_i32, %c0_i32_0 : i32, i32
  }
  func.func @transform_7(%arg0: i32) -> (i32, i32, i32, i32) {
    %c0_i32 = arith.constant 0 : i32
    %c0_i32_0 = arith.constant 0 : i32
    %c0_i32_1 = arith.constant 0 : i32
    %c0_i32_2 = arith.constant 0 : i32
    return %arg0, %c0_i32, %c0_i32_0, %c0_i32_1 : i32, i32, i32, i32
  }
}

</mosaic_0001>

<llo_original>
// kernel: down_pallas.1
$region0: #{down_pallas.1}
  #allocation0 [shape = 'u32[]', space=smem, size = 0x4, offset = 0x4, fixed_abs, tag = 'smem constant byte address 0x4 - core index']
  #allocation1 [shape = 'u32[144,128]{1,0:T(1,128)}', space=vmem, size = 0x12000, scoped, tag = 'internal scratch']
  #allocation2 [shape = 'f32[10,10,4]{2,1,0:T(8,128)}', space=vmem, size = 0x14000, scoped, tag = 'scratch operand']
  #allocation3 [shape = 'f32[10,10,8]{2,1,0:T(8,128)}', space=vmem, size = 0x14000, scoped, tag = 'scratch operand']
  %s0 = inlined_call_operand.vmem [shape: bf16[2,8,2,8,8], index: 0, kind: input, shape index: {}]
  %s1 = inlined_call_operand.vmem [shape: bf16[3,3,4,8], index: 1, kind: input, shape index: {}]
  %s2 = inlined_call_operand.vmem [shape: bf16[3,3,8,8], index: 2, kind: input, shape index: {}]
  %s3 = inlined_call_operand.vmem [shape: f32[1,8], index: 3, kind: input, shape index: {}]
  %s4 = inlined_call_operand.vmem [shape: f32[1,8], index: 4, kind: input, shape index: {}]
  %s5 = inlined_call_operand.vmem [shape: f32[1,8], index: 5, kind: input, shape index: {}]
  %s6 = inlined_call_operand.vmem [shape: f32[1,8], index: 6, kind: input, shape index: {}]
  %s7 = inlined_call_operand.vmem [shape: f32[2,8,8,8], index: 7, kind: output, shape index: {}]
  %s8 = sld [smem:[#allocation0]]
  $region61: #{down_pallas.1} parent=0
    _
  %s10 = ssub.s32 1, %s8
  %s11 = scalar_select 0, %s10, %s8
  loop: start=0, step=1, limit=4
  $region2: #{down_pallas.1} parent=0 // loop_pre_header
    _
  $region3: #{down_pallas.1} parent=0 // loop_header
    %s13 = sphi 0, %s17
    %p14 = scmp.ge.s32.totalorder %s13, 4
    %s23 = sphi 0, %s25
    %s26 = sphi 0, %s23
    %s27 = sphi 0, %s26
    %s43 = sphi 0, %s27
    %s47 = sphi 0, %s47
    %s49 = sphi 0, %s47
    %s50 = sphi 0, %s49
    %s64 = sphi 0, %s50
    %s68 = sphi 0, %s68
    %s70 = sphi 0, %s68
    %s71 = sphi 0, %s70
    %s85 = sphi 0, %s71
    %s89 = sphi 0, %s89
    %s91 = sphi 0, %s89
    %s92 = sphi 0, %s91
    %s106 = sphi 0, %s92
    %s110 = sphi 0, %s110
    %s112 = sphi 0, %s110
    %s113 = sphi 0, %s112
    %s127 = sphi 0, %s113
    %s131 = sphi 0, %s131
    %s133 = sphi 0, %s131
    %s134 = sphi 0, %s133
    %s148 = sphi 0, %s134
    %s152 = sphi 0, %s152
    %s154 = sphi 0, %s152
    %s155 = sphi 0, %s154
    %s169 = sphi 0, %s155
    %s175 = sphi 0, %s177
    %s178 = sphi 0, %s175
    %s179 = sphi 0, %s178
    %s195 = sphi 0, %s179
  $region4: #{down_pallas.1} parent=0 // loop_header_branch
    %16 = sbr.rel (%p14) target = $region8
  $region5: #{down_pallas.1} parent=0 // loop_body
    %s18 = ssub.s32 %s13, 1
    %s19 = ssub.s32 %s13, 2
    %s20 = sadd.s32 %s13, 1
    %s21 = ssub.s32 %s13, %s20
    %p22 = scmp.eq.s32.totalorder %s21, 0
    %s24 = sadd.s32 %s23, 1
    %s25 = scalar_select %p22, %s23, %s24
    %p28 = pneg %p22
    %p29 = scmp.eq.s32.totalorder %s13, 1
    %p30 = por %p28, %p29
    %p31 = scmp.ne.s32.totalorder %s23, %s26
    %p32 = scmp.eq.s32.totalorder %s13, 0
    %p33 = por %p31, %p32
    %p34 = scmp.ne.s32.totalorder %s23, %s26
    %p35 = scmp.eq.s32.totalorder %s18, 1
    %p36 = por %p34, %p35
    %p37 = scmp.ne.s32.totalorder %s26, %s27
    %p38 = scmp.eq.s32.totalorder %s18, 0
    %p39 = por %p37, %p38
    %p40 = scmp.ne.s32.totalorder %s26, %s27
    %p41 = scmp.eq.s32.totalorder %s19, 1
    %p42 = por %p40, %p41
    %p44 = scmp.ne.s32.totalorder %s27, %s43
    %p45 = scmp.eq.s32.totalorder %s19, 0
    %p46 = por %p44, %p45
    %s48 = sadd.s32 %s47, 1
    %p51 = scmp.eq.s32.totalorder %s13, 1
    %p52 = scmp.ne.s32.totalorder %s47, %s49
    %p53 = scmp.eq.s32.totalorder %s13, 0
    %p54 = por %p52, %p53
    %p55 = scmp.ne.s32.totalorder %s47, %s49
    %p56 = scmp.eq.s32.totalorder %s18, 1
    %p57 = por %p55, %p56
    %p58 = scmp.ne.s32.totalorder %s49, %s50
    %p59 = scmp.eq.s32.totalorder %s18, 0
    %p60 = por %p58, %p59
    %p61 = scmp.ne.s32.totalorder %s49, %s50
    %p62 = scmp.eq.s32.totalorder %s19, 1
    %p63 = por %p61, %p62
    %p65 = scmp.ne.s32.totalorder %s50, %s64
    %p66 = scmp.eq.s32.totalorder %s19, 0
    %p67 = por %p65, %p66
    %s69 = sadd.s32 %s68, 1
    %p72 = scmp.eq.s32.totalorder %s13, 1
    %p73 = scmp.ne.s32.totalorder %s68, %s70
    %p74 = scmp.eq.s32.totalorder %s13, 0
    %p75 = por %p73, %p74
    %p76 = scmp.ne.s32.totalorder %s68, %s70
    %p77 = scmp.eq.s32.totalorder %s18, 1
    %p78 = por %p76, %p77
    %p79 = scmp.ne.s32.totalorder %s70, %s71
    %p80 = scmp.eq.s32.totalorder %s18, 0
    %p81 = por %p79, %p80
    %p82 = scmp.ne.s32.totalorder %s70, %s71
    %p83 = scmp.eq.s32.totalorder %s19, 1
    %p84 = por %p82, %p83
    %p86 = scmp.ne.s32.totalorder %s71, %s85
    %p87 = scmp.eq.s32.totalorder %s19, 0
    %p88 = por %p86, %p87
    %s90 = sadd.s32 %s89, 1
    %p93 = scmp.eq.s32.totalorder %s13, 1
    %p94 = scmp.ne.s32.totalorder %s89, %s91
    %p95 = scmp.eq.s32.totalorder %s13, 0
    %p96 = por %p94, %p95
    %p97 = scmp.ne.s32.totalorder %s89, %s91
    %p98 = scmp.eq.s32.totalorder %s18, 1
    %p99 = por %p97, %p98
    %p100 = scmp.ne.s32.totalorder %s91, %s92
    %p101 = scmp.eq.s32.totalorder %s18, 0
    %p102 = por %p100, %p101
    %p103 = scmp.ne.s32.totalorder %s91, %s92
    %p104 = scmp.eq.s32.totalorder %s19, 1
    %p105 = por %p103, %p104
    %p107 = scmp.ne.s32.totalorder %s92, %s106
    %p108 = scmp.eq.s32.totalorder %s19, 0
    %p109 = por %p107, %p108
    %s111 = sadd.s32 %s110, 1
    %p114 = scmp.eq.s32.totalorder %s13, 1
    %p115 = scmp.ne.s32.totalorder %s110, %s112
    %p116 = scmp.eq.s32.totalorder %s13, 0
    %p117 = por %p115, %p116
    %p118 = scmp.ne.s32.totalorder %s110, %s112
    %p119 = scmp.eq.s32.totalorder %s18, 1
    %p120 = por %p118, %p119
    %p121 = scmp.ne.s32.totalorder %s112, %s113
    %p122 = scmp.eq.s32.totalorder %s18, 0
    %p123 = por %p121, %p122
    %p124 = scmp.ne.s32.totalorder %s112, %s113
    %p125 = scmp.eq.s32.totalorder %s19, 1
    %p126 = por %p124, %p125
    %p128 = scmp.ne.s32.totalorder %s113, %s127
    %p129 = scmp.eq.s32.totalorder %s19, 0
    %p130 = por %p128, %p129
    %s132 = sadd.s32 %s131, 1
    %p135 = scmp.eq.s32.totalorder %s13, 1
    %p136 = scmp.ne.s32.totalorder %s131, %s133
    %p137 = scmp.eq.s32.totalorder %s13, 0
    %p138 = por %p136, %p137
    %p139 = scmp.ne.s32.totalorder %s131, %s133
    %p140 = scmp.eq.s32.totalorder %s18, 1
    %p141 = por %p139, %p140
    %p142 = scmp.ne.s32.totalorder %s133, %s134
    %p143 = scmp.eq.s32.totalorder %s18, 0
    %p144 = por %p142, %p143
    %p145 = scmp.ne.s32.totalorder %s133, %s134
    %p146 = scmp.eq.s32.totalorder %s19, 1
    %p147 = por %p145, %p146
    %p149 = scmp.ne.s32.totalorder %s134, %s148
    %p150 = scmp.eq.s32.totalorder %s19, 0
    %p151 = por %p149, %p150
    %s153 = sadd.s32 %s152, 1
    %p156 = scmp.eq.s32.totalorder %s13, 1
    %p157 = scmp.ne.s32.totalorder %s152, %s154
    %p158 = scmp.eq.s32.totalorder %s13, 0
    %p159 = por %p157, %p158
    %p160 = scmp.ne.s32.totalorder %s152, %s154
    %p161 = scmp.eq.s32.totalorder %s18, 1
    %p162 = por %p160, %p161
    %p163 = scmp.ne.s32.totalorder %s154, %s155
    %p164 = scmp.eq.s32.totalorder %s18, 0
    %p165 = por %p163, %p164
    %p166 = scmp.ne.s32.totalorder %s154, %s155
    %p167 = scmp.eq.s32.totalorder %s19, 1
    %p168 = por %p166, %p167
    %p170 = scmp.ne.s32.totalorder %s155, %s169
    %p171 = scmp.eq.s32.totalorder %s19, 0
    %p172 = por %p170, %p171
    %s173 = ssub.s32 %s13, %s20
    %p174 = scmp.eq.s32.totalorder %s173, 0
    %s176 = sadd.s32 %s175, 1
    %s177 = scalar_select %p174, %s175, %s176
    %p180 = pneg %p174
    %p181 = scmp.eq.s32.totalorder %s13, 1
    %p182 = por %p180, %p181
    %p183 = scmp.ne.s32.totalorder %s175, %s178
    %p184 = scmp.eq.s32.totalorder %s13, 0
    %p185 = por %p183, %p184
    %p186 = scmp.ne.s32.totalorder %s175, %s178
    %p187 = scmp.eq.s32.totalorder %s18, 1
    %p188 = por %p186, %p187
    %p189 = scmp.ne.s32.totalorder %s178, %s179
    %p190 = scmp.eq.s32.totalorder %s18, 0
    %p191 = por %p189, %p190
    %p192 = scmp.ne.s32.totalorder %s178, %s179
    %p193 = scmp.eq.s32.totalorder %s19, 1
    %p194 = por %p192, %p193
    %p196 = scmp.ne.s32.totalorder %s179, %s195
    %p197 = scmp.eq.s32.totalorder %s19, 0
    %p198 = por %p196, %p197
    %p199 = scmp.le.s32.totalorder 1, %s13
    %p200 = scmp.lt.s32.totalorder %s13, 3
    %p201 = pnand %p199, %p200
    %p202 = pneg %p201
    // Predicated region
    $region9: #{down_pallas.1} parent=5 // pred_check
      _
    $region10: #{down_pallas.1} parent=5 // pred_check_branch
      %204 = sbr.rel (%p201) target = $region12
    $region11: #{down_pallas.1} parent=5 // pred_region
      %s205 = ssub.s32 %s13, 1
      // Predicated region
      $region13: #{down_pallas.1} parent=11 // pred_check
        %p206 = pneg %p60
      $region14: #{down_pallas.1} parent=11 // pred_check_branch
        %208 = sbr.rel (%p206) target = $region16
      $region15: #{down_pallas.1} parent=11 // pred_region
        _
      $region16: #{down_pallas.1} parent=11 // pred_fallthru
        _
      // Predicated region
      $region17: #{down_pallas.1} parent=11 // pred_check
        %p209 = pneg %p81
      $region18: #{down_pallas.1} parent=11 // pred_check_branch
        %211 = sbr.rel (%p209) target = $region20
      $region19: #{down_pallas.1} parent=11 // pred_region
        _
      $region20: #{down_pallas.1} parent=11 // pred_fallthru
        _
      // Predicated region
      $region21: #{down_pallas.1} parent=11 // pred_check
        %p212 = pneg %p102
      $region22: #{down_pallas.1} parent=11 // pred_check_branch
        %214 = sbr.rel (%p212) target = $region24
      $region23: #{down_pallas.1} parent=11 // pred_region
        _
      $region24: #{down_pallas.1} parent=11 // pred_fallthru
        _
      // Predicated region
      $region25: #{down_pallas.1} parent=11 // pred_check
        %p215 = pneg %p123
      $region26: #{down_pallas.1} parent=11 // pred_check_branch
        %217 = sbr.rel (%p215) target = $region28
      $region27: #{down_pallas.1} parent=11 // pred_region
        _
      $region28: #{down_pallas.1} parent=11 // pred_fallthru
        _
      // Predicated region
      $region29: #{down_pallas.1} parent=11 // pred_check
        %p218 = pneg %p144
      $region30: #{down_pallas.1} parent=11 // pred_check_branch
        %220 = sbr.rel (%p218) target = $region32
      $region31: #{down_pallas.1} parent=11 // pred_region
        _
      $region32: #{down_pallas.1} parent=11 // pred_fallthru
        _
      // Predicated region
      $region33: #{down_pallas.1} parent=11 // pred_check
        %p221 = pneg %p165
      $region34: #{down_pallas.1} parent=11 // pred_check_branch
        %223 = sbr.rel (%p221) target = $region36
      $region35: #{down_pallas.1} parent=11 // pred_region
        _
      $region36: #{down_pallas.1} parent=11 // pred_fallthru
        _
    $region12: #{down_pallas.1} parent=5 // pred_fallthru
      _
    %p224 = scmp.lt.s32.totalorder %s13, 2
    // Predicated region
    $region37: #{down_pallas.1} parent=5 // pred_check
      %p225 = pneg %p224
    $region38: #{down_pallas.1} parent=5 // pred_check_branch
      %227 = sbr.rel (%p225) target = $region40
    $region39: #{down_pallas.1} parent=5 // pred_region
      // Predicated region
      $region41: #{down_pallas.1} parent=39 // pred_check
        %p228 = pneg %p33
      $region42: #{down_pallas.1} parent=39 // pred_check_branch
        %230 = sbr.rel (%p228) target = $region44
      $region43: #{down_pallas.1} parent=39 // pred_region
        %p231 = scmp.lt.s32.totalorder %s13, 1
        %s232 = scalar_select %p231, %s13, 1
        %s233 = smul.addr %s232, 16
        %s234 = smul.addr %s233, 4
        %s235 = scalar_lea.vmem %s0, %s234
      $region44: #{down_pallas.1} parent=39 // pred_fallthru
        _
    $region40: #{down_pallas.1} parent=5 // pred_fallthru
      _
    %p236 = scmp.le.s32.totalorder 1, %s13
    %p237 = scmp.lt.s32.totalorder %s13, 3
    %p238 = pnand %p236, %p237
    %p239 = pneg %p238
    // Predicated region
    $region45: #{down_pallas.1} parent=5 // pred_check
      _
    $region46: #{down_pallas.1} parent=5 // pred_check_branch
      %241 = sbr.rel (%p238) target = $region48
    $region47: #{down_pallas.1} parent=5 // pred_region
      %s242 = ssub.s32 %s13, 1
      %p243 = scmp.lt.s32.totalorder %s18, 1
      %s244 = scalar_select %p243, %s18, 1
      %s245 = smul.addr %s244, 16
      %s246 = smul.addr %s245, 4
      %s247 = scalar_lea.vmem %s0, %s246
      %p248 = pneg %p39
      %p249 = pneg %p36
      %p250 = pneg %p60
      %p251 = pneg %p57
      %p252 = pneg %p81
      %p253 = pneg %p78
      %p254 = pneg %p102
      %p255 = pneg %p99
      %p256 = pneg %p123
      %p257 = pneg %p120
      %p258 = pneg %p144
      %p259 = pneg %p141
      %p260 = pneg %p165
      %p261 = pneg %p162
      %p262 = pneg %p191
      %p263 = pneg %p188
      %p264 = scmp.lt.s32.totalorder %s18, 1
      %s265 = scalar_select %p264, %s18, 1
      %s266 = smul.addr %s265, 8
      %s267 = smul.addr %s266, 8
      %s268 = scalar_lea.vmem %s7, %s267
      %p269 = scmp.lt.s32.totalorder %s18, 1
      %s270 = scalar_select %p269, %s18, 1
      %s271 = smul.addr %s270, 16
      %s272 = smul.addr %s271, 4
      %s273 = scalar_lea.vmem %s0, %s272
      %p274 = scmp.lt.s32.totalorder %s18, 1
      %s275 = scalar_select %p274, %s18, 1
      %s276 = smul.addr %s275, 8
      %s277 = smul.addr %s276, 8
      %s278 = scalar_lea.vmem %s7, %s277
      %vm280 = vcmask 31744
      %281 = vst.msk [vmem:[#allocation2] sm:$0xff] %vm280, 0.0
      %vm282 = vcmask 25600
      %283 = vst.msk [vmem:[#allocation2 + $0x8] sm:$0x3] %vm282, 0.0
      %s284 = scalar_lea.vmem [#allocation2], 144
      %285 = vst.msk [vmem:[%s284] sm:$0xff] %vm280, 0.0
      %286 = vst.msk [vmem:[%s284 + $0x8] sm:$0x3] %vm282, 0.0
      %vm287 = vcmask 24576
      %288 = vst.msk [vmem:[#allocation2] sm:$0x1] %vm287, 0.0
      %289 = vst.msk [vmem:[#allocation2 + $0x10] sm:$0x1] %vm287, 0.0
      %290 = vst.msk [vmem:[#allocation2 + $0x20] sm:$0x1] %vm287, 0.0
      %291 = vst.msk [vmem:[#allocation2 + $0x30] sm:$0x1] %vm287, 0.0
      %292 = vst.msk [vmem:[#allocation2 + $0x40] sm:$0x1] %vm287, 0.0
      %293 = vst.msk [vmem:[#allocation2 + $0x50] sm:$0x1] %vm287, 0.0
      %294 = vst.msk [vmem:[#allocation2 + $0x60] sm:$0x1] %vm287, 0.0
      %295 = vst.msk [vmem:[#allocation2 + $0x70] sm:$0x1] %vm287, 0.0
      %296 = vst.msk [vmem:[#allocation2 + $0x80] sm:$0x1] %vm287, 0.0
      %297 = vst.msk [vmem:[#allocation2 + $0x90] sm:$0x1] %vm287, 0.0
      %298 = vst.msk [vmem:[#allocation2 + $0x9] sm:$0x1] %vm287, 0.0
      %299 = vst.msk [vmem:[#allocation2 + $0x19] sm:$0x1] %vm287, 0.0
      %300 = vst.msk [vmem:[#allocation2 + $0x29] sm:$0x1] %vm287, 0.0
      %301 = vst.msk [vmem:[#allocation2 + $0x39] sm:$0x1] %vm287, 0.0
      %302 = vst.msk [vmem:[#allocation2 + $0x49] sm:$0x1] %vm287, 0.0
      %303 = vst.msk [vmem:[#allocation2 + $0x59] sm:$0x1] %vm287, 0.0
      %304 = vst.msk [vmem:[#allocation2 + $0x69] sm:$0x1] %vm287, 0.0
      %305 = vst.msk [vmem:[#allocation2 + $0x79] sm:$0x1] %vm287, 0.0
      %306 = vst.msk [vmem:[#allocation2 + $0x89] sm:$0x1] %vm287, 0.0
      %307 = vst.msk [vmem:[#allocation2 + $0x99] sm:$0x1] %vm287, 0.0
      %vm308 = vcmask 64512
      %309 = vst.msk [vmem:[#allocation3] sm:$0xff] %vm308, 0.0
      %vm310 = vcmask 58368
      %311 = vst.msk [vmem:[#allocation3 + $0x8] sm:$0x3] %vm310, 0.0
      %s312 = scalar_lea.vmem [#allocation3], 144
      %313 = vst.msk [vmem:[%s312] sm:$0xff] %vm308, 0.0
      %314 = vst.msk [vmem:[%s312 + $0x8] sm:$0x3] %vm310, 0.0
      %vm315 = vcmask 57344
      %316 = vst.msk [vmem:[#allocation3] sm:$0x1] %vm315, 0.0
      %317 = vst.msk [vmem:[#allocation3 + $0x10] sm:$0x1] %vm315, 0.0
      %318 = vst.msk [vmem:[#allocation3 + $0x20] sm:$0x1] %vm315, 0.0
      %319 = vst.msk [vmem:[#allocation3 + $0x30] sm:$0x1] %vm315, 0.0
      %320 = vst.msk [vmem:[#allocation3 + $0x40] sm:$0x1] %vm315, 0.0
      %321 = vst.msk [vmem:[#allocation3 + $0x50] sm:$0x1] %vm315, 0.0
      %322 = vst.msk [vmem:[#allocation3 + $0x60] sm:$0x1] %vm315, 0.0
      %323 = vst.msk [vmem:[#allocation3 + $0x70] sm:$0x1] %vm315, 0.0
      %324 = vst.msk [vmem:[#allocation3 + $0x80] sm:$0x1] %vm315, 0.0
      %325 = vst.msk [vmem:[#allocation3 + $0x90] sm:$0x1] %vm315, 0.0
      %326 = vst.msk [vmem:[#allocation3 + $0x9] sm:$0x1] %vm315, 0.0
      %327 = vst.msk [vmem:[#allocation3 + $0x19] sm:$0x1] %vm315, 0.0
      %328 = vst.msk [vmem:[#allocation3 + $0x29] sm:$0x1] %vm315, 0.0
      %329 = vst.msk [vmem:[#allocation3 + $0x39] sm:$0x1] %vm315, 0.0
      %330 = vst.msk [vmem:[#allocation3 + $0x49] sm:$0x1] %vm315, 0.0
      %331 = vst.msk [vmem:[#allocation3 + $0x59] sm:$0x1] %vm315, 0.0
      %332 = vst.msk [vmem:[#allocation3 + $0x69] sm:$0x1] %vm315, 0.0
      %333 = vst.msk [vmem:[#allocation3 + $0x79] sm:$0x1] %vm315, 0.0
      %334 = vst.msk [vmem:[#allocation3 + $0x89] sm:$0x1] %vm315, 0.0
      %335 = vst.msk [vmem:[#allocation3 + $0x99] sm:$0x1] %vm315, 0.0
      %v336 = vld [vmem:[%s273] sm:$0xf]
      %v337 = vld [vmem:[%s273 + $0x4] sm:$0xf]
      %v338 = vld [vmem:[%s273 + $0x8] sm:$0xf]
      %v339 = vld [vmem:[%s273 + $0xc] sm:$0xf]
      %v340 = vld [vmem:[%s273 + $0x10] sm:$0xf]
      %v341 = vld [vmem:[%s273 + $0x14] sm:$0xf]
      %v342 = vld [vmem:[%s273 + $0x18] sm:$0xf]
      %v343 = vld [vmem:[%s273 + $0x1c] sm:$0xf]
      %v344 = vld [vmem:[%s273 + $0x20] sm:$0xf]
      %v345 = vld [vmem:[%s273 + $0x24] sm:$0xf]
      %v346 = vld [vmem:[%s273 + $0x28] sm:$0xf]
      %v347 = vld [vmem:[%s273 + $0x2c] sm:$0xf]
      %v348 = vld [vmem:[%s273 + $0x30] sm:$0xf]
      %v349 = vld [vmem:[%s273 + $0x34] sm:$0xf]
      %v350 = vld [vmem:[%s273 + $0x38] sm:$0xf]
      %v351 = vld [vmem:[%s273 + $0x3c] sm:$0xf]
      %v352 = vmax.bf16 %v336, %v337
      %v353 = vmax.bf16 %v338, %v339
      %v354 = vmax.bf16 %v340, %v341
      %v355 = vmax.bf16 %v342, %v343
      %v356 = vmax.bf16 %v344, %v345
      %v357 = vmax.bf16 %v346, %v347
      %v358 = vmax.bf16 %v348, %v349
      %v359 = vmax.bf16 %v350, %v351
      %368 = vrot.lane.b32.xlu0 %v352, 124
      %v369 = vpop.permute.xlu0 %368
      %370 = vrot.lane.b32.xlu0 %v353, 124
      %v371 = vpop.permute.xlu0 %370
      %372 = vrot.lane.b32.xlu0 %v354, 124
      %v373 = vpop.permute.xlu0 %372
      %374 = vrot.lane.b32.xlu0 %v355, 124
      %v375 = vpop.permute.xlu0 %374
      %376 = vrot.lane.b32.xlu0 %v356, 124
      %v377 = vpop.permute.xlu0 %376
      %378 = vrot.lane.b32.xlu0 %v357, 124
      %v379 = vpop.permute.xlu0 %378
      %380 = vrot.lane.b32.xlu0 %v358, 124
      %v381 = vpop.permute.xlu0 %380
      %382 = vrot.lane.b32.xlu0 %v359, 124
      %v383 = vpop.permute.xlu0 %382
      %v392 = vmax.bf16 %v352, %v369
      %v393 = vmax.bf16 %v353, %v371
      %v394 = vmax.bf16 %v354, %v373
      %v395 = vmax.bf16 %v355, %v375
      %v396 = vmax.bf16 %v356, %v377
      %v397 = vmax.bf16 %v357, %v379
      %v398 = vmax.bf16 %v358, %v381
      %v399 = vmax.bf16 %v359, %v383
      %v400 = vunpack.c.l.bf16 %v392
      %v401 = vunpack.c.l.bf16 %v393
      %v402 = vunpack.c.l.bf16 %v394
      %v403 = vunpack.c.l.bf16 %v395
      %v404 = vunpack.c.l.bf16 %v396
      %v405 = vunpack.c.l.bf16 %v397
      %v406 = vunpack.c.l.bf16 %v398
      %v407 = vunpack.c.l.bf16 %v399
      %s408 = scalar_lea.vmem [#allocation2], 16
      %409 = vst.msk [vmem:[%s408 + $0x1] sm:$0xff] %vm280, %v400
      %410 = vst.msk [vmem:[%s408 + $0x11] sm:$0xff] %vm280, %v401
      %411 = vst.msk [vmem:[%s408 + $0x21] sm:$0xff] %vm280, %v402
      %412 = vst.msk [vmem:[%s408 + $0x31] sm:$0xff] %vm280, %v403
      %413 = vst.msk [vmem:[%s408 + $0x41] sm:$0xff] %vm280, %v404
      %414 = vst.msk [vmem:[%s408 + $0x51] sm:$0xff] %vm280, %v405
      %415 = vst.msk [vmem:[%s408 + $0x61] sm:$0xff] %vm280, %v406
      %416 = vst.msk [vmem:[%s408 + $0x71] sm:$0xff] %vm280, %v407
      %v417 = vld [vmem:[#allocation2] sm:$0xff]
      %v418 = vld [vmem:[#allocation2 + $0x8] sm:$0x3]
      %v419 = vld [vmem:[#allocation2 + $0x10] sm:$0xff]
      %v420 = vld [vmem:[#allocation2 + $0x18] sm:$0x3]
      %v421 = vld [vmem:[#allocation2 + $0x20] sm:$0xff]
      %v422 = vld [vmem:[#allocation2 + $0x28] sm:$0x3]
      %v423 = vld [vmem:[#allocation2 + $0x30] sm:$0xff]
      %v424 = vld [vmem:[#allocation2 + $0x38] sm:$0x3]
      %v425 = vld [vmem:[#allocation2 + $0x40] sm:$0xff]
      %v426 = vld [vmem:[#allocation2 + $0x48] sm:$0x3]
      %v427 = vld [vmem:[#allocation2 + $0x50] sm:$0xff]
      %v428 = vld [vmem:[#allocation2 + $0x58] sm:$0x3]
      %v429 = vld [vmem:[#allocation2 + $0x60] sm:$0xff]
      %v430 = vld [vmem:[#allocation2 + $0x68] sm:$0x3]
      %v431 = vld [vmem:[#allocation2 + $0x70] sm:$0xff]
      %v432 = vld [vmem:[#allocation2 + $0x78] sm:$0x3]
      %v433 = vld [vmem:[#allocation2 + $0x80] sm:$0xff]
      %v434 = vld [vmem:[#allocation2 + $0x88] sm:$0x3]
      %v435 = vld [vmem:[#allocation2 + $0x90] sm:$0xff]
      %v436 = vld [vmem:[#allocation2 + $0x98] sm:$0x3]
      %v437 = vpack.c.bf16 %v419, %v417
      %v438 = vpack.c.bf16 %v423, %v421
      %v439 = vpack.c.bf16 %v427, %v425
      %v440 = vpack.c.bf16 %v431, %v429
      %v441 = vld [vmem:[%s1] sm:$0x3]
      %vm458 = vcmask 1046528
      %v459 = vrot.slane %v417, 1
      %v460 = vrot.slane %v418, 1
      %v461 = vsel %vm458, %v459, %v460
      %v462 = vrot.slane %v419, 1
      %v463 = vrot.slane %v420, 1
      %v464 = vsel %vm458, %v462, %v463
      %v465 = vrot.slane %v421, 1
      %v466 = vrot.slane %v422, 1
      %v467 = vsel %vm458, %v465, %v466
      %v468 = vrot.slane %v423, 1
      %v469 = vrot.slane %v424, 1
      %v470 = vsel %vm458, %v468, %v469
      %v471 = vrot.slane %v425, 1
      %v472 = vrot.slane %v426, 1
      %v473 = vsel %vm458, %v471, %v472
      %v474 = vrot.slane %v427, 1
      %v475 = vrot.slane %v428, 1
      %v476 = vsel %vm458, %v474, %v475
      %v477 = vrot.slane %v429, 1
      %v478 = vrot.slane %v430, 1
      %v479 = vsel %vm458, %v477, %v478
      %v480 = vrot.slane %v431, 1
      %v481 = vrot.slane %v432, 1
      %v482 = vsel %vm458, %v480, %v481
      %v491 = vpack.c.bf16 %v464, %v461
      %v492 = vpack.c.bf16 %v470, %v467
      %v493 = vpack.c.bf16 %v476, %v473
      %v494 = vpack.c.bf16 %v482, %v479
      %s495 = scalar_lea.vmem %s1, 2
      %v496 = vld [vmem:[%s495] sm:$0x3]
      %v498 = vsel %vm280, %v491, 0
      %v501 = vsel %vm280, %v492, 0
      %v504 = vsel %vm280, %v493, 0
      %v507 = vsel %vm280, %v494, 0
      %vm509 = vcmask 1041408
      %v511 = vsel %vm509, %v496, 0
      %513 = vmatprep.subr.bf16.mxu0 0
      %514 = vmatpush1.bf16.msra.mxu0 0
      %515 = vmatprep.subr.bf16.mxu0 0
      %516 = vmatpush1.bf16.msra.mxu0 0
      %517 = vmatprep.subr.bf16.mxu0 0
      %518 = vmatpush1.bf16.msra.mxu0 0
      %519 = vmatprep.subr.bf16.mxu0 0
      %520 = vmatpush1.bf16.msra.mxu0 0
      %521 = vmatprep.subr.bf16.mxu0 0
      %522 = vmatpush1.bf16.msra.mxu0 0
      %523 = vmatprep.subr.bf16.mxu0 0
      %524 = vmatpush1.bf16.msra.mxu0 0
      %525 = vmatprep.subr.bf16.mxu0 0
      %526 = vmatpush1.bf16.msra.mxu0 0
      %527 = vmatprep.subr.bf16.mxu0 0
      %528 = vmatpush1.bf16.msra.mxu0 %v511
      %529 = vmatprep.subr.bf16.mxu0 0
      %530 = vmatpush2.bf16.msra.mxu0 0
      %531 = vmatprep.subr.bf16.mxu0 0
      %532 = vmatpush2.bf16.msra.mxu0 0
      %533 = vmatprep.subr.bf16.mxu0 0
      %534 = vmatpush2.bf16.msra.mxu0 0
      %535 = vmatprep.subr.bf16.mxu0 0
      %536 = vmatpush2.bf16.msra.mxu0 0
      %537 = vmatprep.subr.bf16.mxu0 0
      %538 = vmatpush2.bf16.msra.mxu0 0
      %539 = vmatprep.subr.bf16.mxu0 0
      %540 = vmatpush2.bf16.msra.mxu0 0
      %541 = vmatprep.subr.bf16.mxu0 0
      %542 = vmatpush2.bf16.msra.mxu0 0
      %543 = vmatprep.subr.bf16.mxu0 0
      %544 = vmatpush2.bf16.msra.mxu0 0
      %545 = vmatprep.mubr.bf16.mxu0 0
      %546 = vmatmul.mubr.bf16.gmra.mxu0 %v498
      %v547 = vpop.f32.mrf.mxu0
      %v548 = vadd.f32 0.0, %v547
      %v549 = vpop.f32.mrf.mxu0
      %v550 = vpop.f32.mrf.mxu0
      %v551 = vadd.f32 0.0, %v550
      %v552 = vpop.f32.mrf.mxu0
      %553 = vmatprep.mubr.bf16.mxu0 0
      %554 = vmatmul.mubr.bf16.gmra.mxu0 %v501
      %v555 = vpop.f32.mrf.mxu0
      %v556 = vadd.f32 0.0, %v555
      %v557 = vpop.f32.mrf.mxu0
      %v558 = vpop.f32.mrf.mxu0
      %v559 = vadd.f32 0.0, %v558
      %v560 = vpop.f32.mrf.mxu0
      %561 = vmatprep.mubr.bf16.mxu0 0
      %562 = vmatmul.mubr.bf16.gmra.mxu0 %v504
      %v563 = vpop.f32.mrf.mxu0
      %v564 = vadd.f32 0.0, %v563
      %v565 = vpop.f32.mrf.mxu0
      %v566 = vpop.f32.mrf.mxu0
      %v567 = vadd.f32 0.0, %v566
      %v568 = vpop.f32.mrf.mxu0
      %569 = vmatprep.mubr.bf16.mxu0 0
      %570 = vmatmul.mubr.bf16.gmra.mxu0 %v507
      %v571 = vpop.f32.mrf.mxu0
      %v572 = vadd.f32 0.0, %v571
      %v573 = vpop.f32.mrf.mxu0
      %v574 = vpop.f32.mrf.mxu0
      %v575 = vadd.f32 0.0, %v574
      %v576 = vpop.f32.mrf.mxu0
      %577 = vdwg.mxu0
      %v579 = vsel %vm280, %v437, 0
      %v582 = vsel %vm280, %v438, 0
      %v585 = vsel %vm280, %v439, 0
      %v588 = vsel %vm280, %v440, 0
      %v591 = vsel %vm509, %v441, 0
      %593 = vmatprep.subr.bf16.mxu0 0
      %594 = vmatpush1.bf16.msra.mxu0 0
      %595 = vmatprep.subr.bf16.mxu0 0
      %596 = vmatpush1.bf16.msra.mxu0 0
      %597 = vmatprep.subr.bf16.mxu0 0
      %598 = vmatpush1.bf16.msra.mxu0 0
      %599 = vmatprep.subr.bf16.mxu0 0
      %600 = vmatpush1.bf16.msra.mxu0 0
      %601 = vmatprep.subr.bf16.mxu0 0
      %602 = vmatpush1.bf16.msra.mxu0 0
      %603 = vmatprep.subr.bf16.mxu0 0
      %604 = vmatpush1.bf16.msra.mxu0 0
      %605 = vmatprep.subr.bf16.mxu0 0
      %606 = vmatpush1.bf16.msra.mxu0 0
      %607 = vmatprep.subr.bf16.mxu0 0
      %608 = vmatpush1.bf16.msra.mxu0 %v591
      %609 = vmatprep.subr.bf16.mxu0 0
      %610 = vmatpush2.bf16.msra.mxu0 0
      %611 = vmatprep.subr.bf16.mxu0 0
      %612 = vmatpush2.bf16.msra.mxu0 0
      %613 = vmatprep.subr.bf16.mxu0 0
      %614 = vmatpush2.bf16.msra.mxu0 0
      %615 = vmatprep.subr.bf16.mxu0 0
      %616 = vmatpush2.bf16.msra.mxu0 0
      %617 = vmatprep.subr.bf16.mxu0 0
      %618 = vmatpush2.bf16.msra.mxu0 0
      %619 = vmatprep.subr.bf16.mxu0 0
      %620 = vmatpush2.bf16.msra.mxu0 0
      %621 = vmatprep.subr.bf16.mxu0 0
      %622 = vmatpush2.bf16.msra.mxu0 0
      %623 = vmatprep.subr.bf16.mxu0 0
      %624 = vmatpush2.bf16.msra.mxu0 0
      %625 = vmatprep.mubr.bf16.mxu0 0
      %626 = vmatmul.mubr.bf16.gmra.mxu0 %v579
      %v627 = vpop.f32.mrf.mxu0
      %v628 = vadd.f32 %v548, %v627
      %v629 = vpop.f32.mrf.mxu0
      %v630 = vpop.f32.mrf.mxu0
      %v631 = vadd.f32 %v551, %v630
      %v632 = vpop.f32.mrf.mxu0
      %633 = vmatprep.mubr.bf16.mxu0 0
      %634 = vmatmul.mubr.bf16.gmra.mxu0 %v582
      %v635 = vpop.f32.mrf.mxu0
      %v636 = vadd.f32 %v556, %v635
      %v637 = vpop.f32.mrf.mxu0
      %v638 = vpop.f32.mrf.mxu0
      %v639 = vadd.f32 %v559, %v638
      %v640 = vpop.f32.mrf.mxu0
      %641 = vmatprep.mubr.bf16.mxu0 0
      %642 = vmatmul.mubr.bf16.gmra.mxu0 %v585
      %v643 = vpop.f32.mrf.mxu0
      %v644 = vadd.f32 %v564, %v643
      %v645 = vpop.f32.mrf.mxu0
      %v646 = vpop.f32.mrf.mxu0
      %v647 = vadd.f32 %v567, %v646
      %v648 = vpop.f32.mrf.mxu0
      %649 = vmatprep.mubr.bf16.mxu0 0
      %650 = vmatmul.mubr.bf16.gmra.mxu0 %v588
      %v651 = vpop.f32.mrf.mxu0
      %v652 = vadd.f32 %v572, %v651
      %v653 = vpop.f32.mrf.mxu0
      %v654 = vpop.f32.mrf.mxu0
      %v655 = vadd.f32 %v575, %v654
      %v656 = vpop.f32.mrf.mxu0
      %657 = vdwg.mxu0
      %vm658 = vcmask 1045504
      %v659 = vrot.slane %v417, 2
      %v660 = vrot.slane %v418, 2
      %v661 = vsel %vm658, %v659, %v660
      %v662 = vrot.slane %v419, 2
      %v663 = vrot.slane %v420, 2
      %v664 = vsel %vm658, %v662, %v663
      %v665 = vrot.slane %v421, 2
      %v666 = vrot.slane %v422, 2
      %v667 = vsel %vm658, %v665, %v666
      %v668 = vrot.slane %v423, 2
      %v669 = vrot.slane %v424, 2
      %v670 = vsel %vm658, %v668, %v669
      %v671 = vrot.slane %v425, 2
      %v672 = vrot.slane %v426, 2
      %v673 = vsel %vm658, %v671, %v672
      %v674 = vrot.slane %v427, 2
      %v675 = vrot.slane %v428, 2
      %v676 = vsel %vm658, %v674, %v675
      %v677 = vrot.slane %v429, 2
      %v678 = vrot.slane %v430, 2
      %v679 = vsel %vm658, %v677, %v678
      %v680 = vrot.slane %v431, 2
      %v681 = vrot.slane %v432, 2
      %v682 = vsel %vm658, %v680, %v681
      %v691 = vpack.c.bf16 %v664, %v661
      %v692 = vpack.c.bf16 %v670, %v667
      %v693 = vpack.c.bf16 %v676, %v673
      %v694 = vpack.c.bf16 %v682, %v679
      %s695 = scalar_lea.vmem %s1, 4
      %v696 = vld [vmem:[%s695] sm:$0x3]
      %v698 = vsel %vm280, %v691, 0
      %v701 = vsel %vm280, %v692, 0
      %v704 = vsel %vm280, %v693, 0
      %v707 = vsel %vm280, %v694, 0
      %v710 = vsel %vm509, %v696, 0
      %712 = vmatprep.subr.bf16.mxu0 0
      %713 = vmatpush1.bf16.msra.mxu0 0
      %714 = vmatprep.subr.bf16.mxu0 0
      %715 = vmatpush1.bf16.msra.mxu0 0
      %716 = vmatprep.subr.bf16.mxu0 0
      %717 = vmatpush1.bf16.msra.mxu0 0
      %718 = vmatprep.subr.bf16.mxu0 0
      %719 = vmatpush1.bf16.msra.mxu0 0
      %720 = vmatprep.subr.bf16.mxu0 0
      %721 = vmatpush1.bf16.msra.mxu0 0
      %722 = vmatprep.subr.bf16.mxu0 0
      %723 = vmatpush1.bf16.msra.mxu0 0
      %724 = vmatprep.subr.bf16.mxu0 0
      %725 = vmatpush1.bf16.msra.mxu0 0
      %726 = vmatprep.subr.bf16.mxu0 0
      %727 = vmatpush1.bf16.msra.mxu0 %v710
      %728 = vmatprep.subr.bf16.mxu0 0
      %729 = vmatpush2.bf16.msra.mxu0 0
      %730 = vmatprep.subr.bf16.mxu0 0
      %731 = vmatpush2.bf16.msra.mxu0 0
      %732 = vmatprep.subr.bf16.mxu0 0
      %733 = vmatpush2.bf16.msra.mxu0 0
      %734 = vmatprep.subr.bf16.mxu0 0
      %735 = vmatpush2.bf16.msra.mxu0 0
      %736 = vmatprep.subr.bf16.mxu0 0
      %737 = vmatpush2.bf16.msra.mxu0 0
      %738 = vmatprep.subr.bf16.mxu0 0
      %739 = vmatpush2.bf16.msra.mxu0 0
      %740 = vmatprep.subr.bf16.mxu0 0
      %741 = vmatpush2.bf16.msra.mxu0 0
      %742 = vmatprep.subr.bf16.mxu0 0
      %743 = vmatpush2.bf16.msra.mxu0 0
      %744 = vmatprep.mubr.bf16.mxu0 0
      %745 = vmatmul.mubr.bf16.gmra.mxu0 %v698
      %v746 = vpop.f32.mrf.mxu0
      %v747 = vadd.f32 0.0, %v746
      %v748 = vpop.f32.mrf.mxu0
      %v749 = vpop.f32.mrf.mxu0
      %v750 = vadd.f32 0.0, %v749
      %v751 = vpop.f32.mrf.mxu0
      %752 = vmatprep.mubr.bf16.mxu0 0
      %753 = vmatmul.mubr.bf16.gmra.mxu0 %v701
      %v754 = vpop.f32.mrf.mxu0
      %v755 = vadd.f32 0.0, %v754
      %v756 = vpop.f32.mrf.mxu0
      %v757 = vpop.f32.mrf.mxu0
      %v758 = vadd.f32 0.0, %v757
      %v759 = vpop.f32.mrf.mxu0
      %760 = vmatprep.mubr.bf16.mxu0 0
      %761 = vmatmul.mubr.bf16.gmra.mxu0 %v704
      %v762 = vpop.f32.mrf.mxu0
      %v763 = vadd.f32 0.0, %v762
      %v764 = vpop.f32.mrf.mxu0
      %v765 = vpop.f32.mrf.mxu0
      %v766 = vadd.f32 0.0, %v765
      %v767 = vpop.f32.mrf.mxu0
      %768 = vmatprep.mubr.bf16.mxu0 0
      %769 = vmatmul.mubr.bf16.gmra.mxu0 %v707
      %v770 = vpop.f32.mrf.mxu0
      %v771 = vadd.f32 0.0, %v770
      %v772 = vpop.f32.mrf.mxu0
      %v773 = vpop.f32.mrf.mxu0
      %v774 = vadd.f32 0.0, %v773
      %v775 = vpop.f32.mrf.mxu0
      %776 = vdwg.mxu0
      %v777 = vadd.f32 %v628, %v747
      %v778 = vadd.f32 %v631, %v750
      %v779 = vadd.f32 %v636, %v755
      %v780 = vadd.f32 %v639, %v758
      %v781 = vadd.f32 %v644, %v763
      %v782 = vadd.f32 %v647, %v766
      %v783 = vadd.f32 %v652, %v771
      %v784 = vadd.f32 %v655, %v774
      %v785 = vpack.c.bf16 %v421, %v419
      %v786 = vpack.c.bf16 %v425, %v423
      %v787 = vpack.c.bf16 %v429, %v427
      %v788 = vpack.c.bf16 %v433, %v431
      %s789 = scalar_lea.vmem %s1, 6
      %v790 = vld [vmem:[%s789] sm:$0x3]
      %v792 = vsel %vm280, %v785, 0
      %v795 = vsel %vm280, %v786, 0
      %v798 = vsel %vm280, %v787, 0
      %v801 = vsel %vm280, %v788, 0
      %v804 = vsel %vm509, %v790, 0
      %806 = vmatprep.subr.bf16.mxu0 0
      %807 = vmatpush1.bf16.msra.mxu0 0
      %808 = vmatprep.subr.bf16.mxu0 0
      %809 = vmatpush1.bf16.msra.mxu0 0
      %810 = vmatprep.subr.bf16.mxu0 0
      %811 = vmatpush1.bf16.msra.mxu0 0
      %812 = vmatprep.subr.bf16.mxu0 0
      %813 = vmatpush1.bf16.msra.mxu0 0
      %814 = vmatprep.subr.bf16.mxu0 0
      %815 = vmatpush1.bf16.msra.mxu0 0
      %816 = vmatprep.subr.bf16.mxu0 0
      %817 = vmatpush1.bf16.msra.mxu0 0
      %818 = vmatprep.subr.bf16.mxu0 0
      %819 = vmatpush1.bf16.msra.mxu0 0
      %820 = vmatprep.subr.bf16.mxu0 0
      %821 = vmatpush1.bf16.msra.mxu0 %v804
      %822 = vmatprep.subr.bf16.mxu0 0
      %823 = vmatpush2.bf16.msra.mxu0 0
      %824 = vmatprep.subr.bf16.mxu0 0
      %825 = vmatpush2.bf16.msra.mxu0 0
      %826 = vmatprep.subr.bf16.mxu0 0
      %827 = vmatpush2.bf16.msra.mxu0 0
      %828 = vmatprep.subr.bf16.mxu0 0
      %829 = vmatpush2.bf16.msra.mxu0 0
      %830 = vmatprep.subr.bf16.mxu0 0
      %831 = vmatpush2.bf16.msra.mxu0 0
      %832 = vmatprep.subr.bf16.mxu0 0
      %833 = vmatpush2.bf16.msra.mxu0 0
      %834 = vmatprep.subr.bf16.mxu0 0
      %835 = vmatpush2.bf16.msra.mxu0 0
      %836 = vmatprep.subr.bf16.mxu0 0
      %837 = vmatpush2.bf16.msra.mxu0 0
      %838 = vmatprep.mubr.bf16.mxu0 0
      %839 = vmatmul.mubr.bf16.gmra.mxu0 %v792
      %v840 = vpop.f32.mrf.mxu0
      %v841 = vadd.f32 0.0, %v840
      %v842 = vpop.f32.mrf.mxu0
      %v843 = vpop.f32.mrf.mxu0
      %v844 = vadd.f32 0.0, %v843
      %v845 = vpop.f32.mrf.mxu0
      %846 = vmatprep.mubr.bf16.mxu0 0
      %847 = vmatmul.mubr.bf16.gmra.mxu0 %v795
      %v848 = vpop.f32.mrf.mxu0
      %v849 = vadd.f32 0.0, %v848
      %v850 = vpop.f32.mrf.mxu0
      %v851 = vpop.f32.mrf.mxu0
      %v852 = vadd.f32 0.0, %v851
      %v853 = vpop.f32.mrf.mxu0
      %854 = vmatprep.mubr.bf16.mxu0 0
      %855 = vmatmul.mubr.bf16.gmra.mxu0 %v798
      %v856 = vpop.f32.mrf.mxu0
      %v857 = vadd.f32 0.0, %v856
      %v858 = vpop.f32.mrf.mxu0
      %v859 = vpop.f32.mrf.mxu0
      %v860 = vadd.f32 0.0, %v859
      %v861 = vpop.f32.mrf.mxu0
      %862 = vmatprep.mubr.bf16.mxu0 0
      %863 = vmatmul.mubr.bf16.gmra.mxu0 %v801
      %v864 = vpop.f32.mrf.mxu0
      %v865 = vadd.f32 0.0, %v864
      %v866 = vpop.f32.mrf.mxu0
      %v867 = vpop.f32.mrf.mxu0
      %v868 = vadd.f32 0.0, %v867
      %v869 = vpop.f32.mrf.mxu0
      %870 = vdwg.mxu0
      %v871 = vadd.f32 %v777, %v841
      %v872 = vadd.f32 %v778, %v844
      %v873 = vadd.f32 %v779, %v849
      %v874 = vadd.f32 %v780, %v852
      %v875 = vadd.f32 %v781, %v857
      %v876 = vadd.f32 %v782, %v860
      %v877 = vadd.f32 %v783, %v865
      %v878 = vadd.f32 %v784, %v868
      %v881 = vrot.slane %v433, 1
      %v882 = vrot.slane %v434, 1
      %v883 = vsel %vm458, %v881, %v882
      %v885 = vpack.c.bf16 %v467, %v464
      %v886 = vpack.c.bf16 %v473, %v470
      %v887 = vpack.c.bf16 %v479, %v476
      %v888 = vpack.c.bf16 %v883, %v482
      %s889 = scalar_lea.vmem %s1, 8
      %v890 = vld [vmem:[%s889] sm:$0x3]
      %v892 = vsel %vm280, %v885, 0
      %v895 = vsel %vm280, %v886, 0
      %v898 = vsel %vm280, %v887, 0
      %v901 = vsel %vm280, %v888, 0
      %v904 = vsel %vm509, %v890, 0
      %906 = vmatprep.subr.bf16.mxu0 0
      %907 = vmatpush1.bf16.msra.mxu0 0
      %908 = vmatprep.subr.bf16.mxu0 0
      %909 = vmatpush1.bf16.msra.mxu0 0
      %910 = vmatprep.subr.bf16.mxu0 0
      %911 = vmatpush1.bf16.msra.mxu0 0
      %912 = vmatprep.subr.bf16.mxu0 0
      %913 = vmatpush1.bf16.msra.mxu0 0
      %914 = vmatprep.subr.bf16.mxu0 0
      %915 = vmatpush1.bf16.msra.mxu0 0
      %916 = vmatprep.subr.bf16.mxu0 0
      %917 = vmatpush1.bf16.msra.mxu0 0
      %918 = vmatprep.subr.bf16.mxu0 0
      %919 = vmatpush1.bf16.msra.mxu0 0
      %920 = vmatprep.subr.bf16.mxu0 0
      %921 = vmatpush1.bf16.msra.mxu0 %v904
      %922 = vmatprep.subr.bf16.mxu0 0
      %923 = vmatpush2.bf16.msra.mxu0 0
      %924 = vmatprep.subr.bf16.mxu0 0
      %925 = vmatpush2.bf16.msra.mxu0 0
      %926 = vmatprep.subr.bf16.mxu0 0
      %927 = vmatpush2.bf16.msra.mxu0 0
      %928 = vmatprep.subr.bf16.mxu0 0
      %929 = vmatpush2.bf16.msra.mxu0 0
      %930 = vmatprep.subr.bf16.mxu0 0
      %931 = vmatpush2.bf16.msra.mxu0 0
      %932 = vmatprep.subr.bf16.mxu0 0
      %933 = vmatpush2.bf16.msra.mxu0 0
      %934 = vmatprep.subr.bf16.mxu0 0
      %935 = vmatpush2.bf16.msra.mxu0 0
      %936 = vmatprep.subr.bf16.mxu0 0
      %937 = vmatpush2.bf16.msra.mxu0 0
      %938 = vmatprep.mubr.bf16.mxu0 0
      %939 = vmatmul.mubr.bf16.gmra.mxu0 %v892
      %v940 = vpop.f32.mrf.mxu0
      %v941 = vadd.f32 0.0, %v940
      %v942 = vpop.f32.mrf.mxu0
      %v943 = vpop.f32.mrf.mxu0
      %v944 = vadd.f32 0.0, %v943
      %v945 = vpop.f32.mrf.mxu0
      %946 = vmatprep.mubr.bf16.mxu0 0
      %947 = vmatmul.mubr.bf16.gmra.mxu0 %v895
      %v948 = vpop.f32.mrf.mxu0
      %v949 = vadd.f32 0.0, %v948
      %v950 = vpop.f32.mrf.mxu0
      %v951 = vpop.f32.mrf.mxu0
      %v952 = vadd.f32 0.0, %v951
      %v953 = vpop.f32.mrf.mxu0
      %954 = vmatprep.mubr.bf16.mxu0 0
      %955 = vmatmul.mubr.bf16.gmra.mxu0 %v898
      %v956 = vpop.f32.mrf.mxu0
      %v957 = vadd.f32 0.0, %v956
      %v958 = vpop.f32.mrf.mxu0
      %v959 = vpop.f32.mrf.mxu0
      %v960 = vadd.f32 0.0, %v959
      %v961 = vpop.f32.mrf.mxu0
      %962 = vmatprep.mubr.bf16.mxu0 0
      %963 = vmatmul.mubr.bf16.gmra.mxu0 %v901
      %v964 = vpop.f32.mrf.mxu0
      %v965 = vadd.f32 0.0, %v964
      %v966 = vpop.f32.mrf.mxu0
      %v967 = vpop.f32.mrf.mxu0
      %v968 = vadd.f32 0.0, %v967
      %v969 = vpop.f32.mrf.mxu0
      %970 = vdwg.mxu0
      %v971 = vadd.f32 %v871, %v941
      %v972 = vadd.f32 %v872, %v944
      %v973 = vadd.f32 %v873, %v949
      %v974 = vadd.f32 %v874, %v952
      %v975 = vadd.f32 %v875, %v957
      %v976 = vadd.f32 %v876, %v960
      %v977 = vadd.f32 %v877, %v965
      %v978 = vadd.f32 %v878, %v968
      %v979 = vrot.slane %v433, 2
      %v980 = vrot.slane %v434, 2
      %v981 = vsel %vm658, %v979, %v980
      %v983 = vpack.c.bf16 %v667, %v664
      %v984 = vpack.c.bf16 %v673, %v670
      %v985 = vpack.c.bf16 %v679, %v676
      %v986 = vpack.c.bf16 %v981, %v682
      %s987 = scalar_lea.vmem %s1, 10
      %v988 = vld [vmem:[%s987] sm:$0x3]
      %v990 = vsel %vm280, %v983, 0
      %v993 = vsel %vm280, %v984, 0
      %v996 = vsel %vm280, %v985, 0
      %v999 = vsel %vm280, %v986, 0
      %v1002 = vsel %vm509, %v988, 0
      %1004 = vmatprep.subr.bf16.mxu0 0
      %1005 = vmatpush1.bf16.msra.mxu0 0
      %1006 = vmatprep.subr.bf16.mxu0 0
      %1007 = vmatpush1.bf16.msra.mxu0 0
      %1008 = vmatprep.subr.bf16.mxu0 0
      %1009 = vmatpush1.bf16.msra.mxu0 0
      %1010 = vmatprep.subr.bf16.mxu0 0
      %1011 = vmatpush1.bf16.msra.mxu0 0
      %1012 = vmatprep.subr.bf16.mxu0 0
      %1013 = vmatpush1.bf16.msra.mxu0 0
      %1014 = vmatprep.subr.bf16.mxu0 0
      %1015 = vmatpush1.bf16.msra.mxu0 0
      %1016 = vmatprep.subr.bf16.mxu0 0
      %1017 = vmatpush1.bf16.msra.mxu0 0
      %1018 = vmatprep.subr.bf16.mxu0 0
      %1019 = vmatpush1.bf16.msra.mxu0 %v1002
      %1020 = vmatprep.subr.bf16.mxu0 0
      %1021 = vmatpush2.bf16.msra.mxu0 0
      %1022 = vmatprep.subr.bf16.mxu0 0
      %1023 = vmatpush2.bf16.msra.mxu0 0
      %1024 = vmatprep.subr.bf16.mxu0 0
      %1025 = vmatpush2.bf16.msra.mxu0 0
      %1026 = vmatprep.subr.bf16.mxu0 0
      %1027 = vmatpush2.bf16.msra.mxu0 0
      %1028 = vmatprep.subr.bf16.mxu0 0
      %1029 = vmatpush2.bf16.msra.mxu0 0
      %1030 = vmatprep.subr.bf16.mxu0 0
      %1031 = vmatpush2.bf16.msra.mxu0 0
      %1032 = vmatprep.subr.bf16.mxu0 0
      %1033 = vmatpush2.bf16.msra.mxu0 0
      %1034 = vmatprep.subr.bf16.mxu0 0
      %1035 = vmatpush2.bf16.msra.mxu0 0
      %1036 = vmatprep.mubr.bf16.mxu0 0
      %1037 = vmatmul.mubr.bf16.gmra.mxu0 %v990
      %v1038 = vpop.f32.mrf.mxu0
      %v1039 = vadd.f32 0.0, %v1038
      %v1040 = vpop.f32.mrf.mxu0
      %v1041 = vpop.f32.mrf.mxu0
      %v1042 = vadd.f32 0.0, %v1041
      %v1043 = vpop.f32.mrf.mxu0
      %1044 = vmatprep.mubr.bf16.mxu0 0
      %1045 = vmatmul.mubr.bf16.gmra.mxu0 %v993
      %v1046 = vpop.f32.mrf.mxu0
      %v1047 = vadd.f32 0.0, %v1046
      %v1048 = vpop.f32.mrf.mxu0
      %v1049 = vpop.f32.mrf.mxu0
      %v1050 = vadd.f32 0.0, %v1049
      %v1051 = vpop.f32.mrf.mxu0
      %1052 = vmatprep.mubr.bf16.mxu0 0
      %1053 = vmatmul.mubr.bf16.gmra.mxu0 %v996
      %v1054 = vpop.f32.mrf.mxu0
      %v1055 = vadd.f32 0.0, %v1054
      %v1056 = vpop.f32.mrf.mxu0
      %v1057 = vpop.f32.mrf.mxu0
      %v1058 = vadd.f32 0.0, %v1057
      %v1059 = vpop.f32.mrf.mxu0
      %1060 = vmatprep.mubr.bf16.mxu0 0
      %1061 = vmatmul.mubr.bf16.gmra.mxu0 %v999
      %v1062 = vpop.f32.mrf.mxu0
      %v1063 = vadd.f32 0.0, %v1062
      %v1064 = vpop.f32.mrf.mxu0
      %v1065 = vpop.f32.mrf.mxu0
      %v1066 = vadd.f32 0.0, %v1065
      %v1067 = vpop.f32.mrf.mxu0
      %1068 = vdwg.mxu0
      %v1069 = vadd.f32 %v971, %v1039
      %v1070 = vadd.f32 %v972, %v1042
      %v1071 = vadd.f32 %v973, %v1047
      %v1072 = vadd.f32 %v974, %v1050
      %v1073 = vadd.f32 %v975, %v1055
      %v1074 = vadd.f32 %v976, %v1058
      %v1075 = vadd.f32 %v977, %v1063
      %v1076 = vadd.f32 %v978, %v1066
      %v1077 = vpack.c.bf16 %v435, %v433
      %s1078 = scalar_lea.vmem %s1, 12
      %v1079 = vld [vmem:[%s1078] sm:$0x3]
      %v1081 = vsel %vm280, %v1077, 0
      %v1084 = vsel %vm509, %v1079, 0
      %1086 = vmatprep.subr.bf16.mxu0 0
      %1087 = vmatpush1.bf16.msra.mxu0 0
      %1088 = vmatprep.subr.bf16.mxu0 0
      %1089 = vmatpush1.bf16.msra.mxu0 0
      %1090 = vmatprep.subr.bf16.mxu0 0
      %1091 = vmatpush1.bf16.msra.mxu0 0
      %1092 = vmatprep.subr.bf16.mxu0 0
      %1093 = vmatpush1.bf16.msra.mxu0 0
      %1094 = vmatprep.subr.bf16.mxu0 0
      %1095 = vmatpush1.bf16.msra.mxu0 0
      %1096 = vmatprep.subr.bf16.mxu0 0
      %1097 = vmatpush1.bf16.msra.mxu0 0
      %1098 = vmatprep.subr.bf16.mxu0 0
      %1099 = vmatpush1.bf16.msra.mxu0 0
      %1100 = vmatprep.subr.bf16.mxu0 0
      %1101 = vmatpush1.bf16.msra.mxu0 %v1084
      %1102 = vmatprep.subr.bf16.mxu0 0
      %1103 = vmatpush2.bf16.msra.mxu0 0
      %1104 = vmatprep.subr.bf16.mxu0 0
      %1105 = vmatpush2.bf16.msra.mxu0 0
      %1106 = vmatprep.subr.bf16.mxu0 0
      %1107 = vmatpush2.bf16.msra.mxu0 0
      %1108 = vmatprep.subr.bf16.mxu0 0
      %1109 = vmatpush2.bf16.msra.mxu0 0
      %1110 = vmatprep.subr.bf16.mxu0 0
      %1111 = vmatpush2.bf16.msra.mxu0 0
      %1112 = vmatprep.subr.bf16.mxu0 0
      %1113 = vmatpush2.bf16.msra.mxu0 0
      %1114 = vmatprep.subr.bf16.mxu0 0
      %1115 = vmatpush2.bf16.msra.mxu0 0
      %1116 = vmatprep.subr.bf16.mxu0 0
      %1117 = vmatpush2.bf16.msra.mxu0 0
      %1118 = vmatprep.mubr.bf16.mxu0 0
      %1119 = vmatmul.mubr.bf16.gmra.mxu0 %v582
      %v1120 = vpop.f32.mrf.mxu0
      %v1121 = vadd.f32 0.0, %v1120
      %v1122 = vpop.f32.mrf.mxu0
      %v1123 = vpop.f32.mrf.mxu0
      %v1124 = vadd.f32 0.0, %v1123
      %v1125 = vpop.f32.mrf.mxu0
      %1126 = vmatprep.mubr.bf16.mxu0 0
      %1127 = vmatmul.mubr.bf16.gmra.mxu0 %v585
      %v1128 = vpop.f32.mrf.mxu0
      %v1129 = vadd.f32 0.0, %v1128
      %v1130 = vpop.f32.mrf.mxu0
      %v1131 = vpop.f32.mrf.mxu0
      %v1132 = vadd.f32 0.0, %v1131
      %v1133 = vpop.f32.mrf.mxu0
      %1134 = vmatprep.mubr.bf16.mxu0 0
      %1135 = vmatmul.mubr.bf16.gmra.mxu0 %v588
      %v1136 = vpop.f32.mrf.mxu0
      %v1137 = vadd.f32 0.0, %v1136
      %v1138 = vpop.f32.mrf.mxu0
      %v1139 = vpop.f32.mrf.mxu0
      %v1140 = vadd.f32 0.0, %v1139
      %v1141 = vpop.f32.mrf.mxu0
      %1142 = vmatprep.mubr.bf16.mxu0 0
      %1143 = vmatmul.mubr.bf16.gmra.mxu0 %v1081
      %v1144 = vpop.f32.mrf.mxu0
      %v1145 = vadd.f32 0.0, %v1144
      %v1146 = vpop.f32.mrf.mxu0
      %v1147 = vpop.f32.mrf.mxu0
      %v1148 = vadd.f32 0.0, %v1147
      %v1149 = vpop.f32.mrf.mxu0
      %1150 = vdwg.mxu0
      %v1151 = vadd.f32 %v1069, %v1121
      %v1152 = vadd.f32 %v1070, %v1124
      %v1153 = vadd.f32 %v1071, %v1129
      %v1154 = vadd.f32 %v1072, %v1132
      %v1155 = vadd.f32 %v1073, %v1137
      %v1156 = vadd.f32 %v1074, %v1140
      %v1157 = vadd.f32 %v1075, %v1145
      %v1158 = vadd.f32 %v1076, %v1148
      %v1161 = vrot.slane %v435, 1
      %v1162 = vrot.slane %v436, 1
      %v1163 = vsel %vm458, %v1161, %v1162
      %v1165 = vpack.c.bf16 %v1163, %v883
      %s1166 = scalar_lea.vmem %s1, 14
      %v1167 = vld [vmem:[%s1166] sm:$0x3]
      %v1169 = vsel %vm280, %v1165, 0
      %v1172 = vsel %vm509, %v1167, 0
      %1174 = vmatprep.subr.bf16.mxu0 0
      %1175 = vmatpush1.bf16.msra.mxu0 0
      %1176 = vmatprep.subr.bf16.mxu0 0
      %1177 = vmatpush1.bf16.msra.mxu0 0
      %1178 = vmatprep.subr.bf16.mxu0 0
      %1179 = vmatpush1.bf16.msra.mxu0 0
      %1180 = vmatprep.subr.bf16.mxu0 0
      %1181 = vmatpush1.bf16.msra.mxu0 0
      %1182 = vmatprep.subr.bf16.mxu0 0
      %1183 = vmatpush1.bf16.msra.mxu0 0
      %1184 = vmatprep.subr.bf16.mxu0 0
      %1185 = vmatpush1.bf16.msra.mxu0 0
      %1186 = vmatprep.subr.bf16.mxu0 0
      %1187 = vmatpush1.bf16.msra.mxu0 0
      %1188 = vmatprep.subr.bf16.mxu0 0
      %1189 = vmatpush1.bf16.msra.mxu0 %v1172
      %1190 = vmatprep.subr.bf16.mxu0 0
      %1191 = vmatpush2.bf16.msra.mxu0 0
      %1192 = vmatprep.subr.bf16.mxu0 0
      %1193 = vmatpush2.bf16.msra.mxu0 0
      %1194 = vmatprep.subr.bf16.mxu0 0
      %1195 = vmatpush2.bf16.msra.mxu0 0
      %1196 = vmatprep.subr.bf16.mxu0 0
      %1197 = vmatpush2.bf16.msra.mxu0 0
      %1198 = vmatprep.subr.bf16.mxu0 0
      %1199 = vmatpush2.bf16.msra.mxu0 0
      %1200 = vmatprep.subr.bf16.mxu0 0
      %1201 = vmatpush2.bf16.msra.mxu0 0
      %1202 = vmatprep.subr.bf16.mxu0 0
      %1203 = vmatpush2.bf16.msra.mxu0 0
      %1204 = vmatprep.subr.bf16.mxu0 0
      %1205 = vmatpush2.bf16.msra.mxu0 0
      %1206 = vmatprep.mubr.bf16.mxu0 0
      %1207 = vmatmul.mubr.bf16.gmra.mxu0 %v501
      %v1208 = vpop.f32.mrf.mxu0
      %v1209 = vadd.f32 0.0, %v1208
      %v1210 = vpop.f32.mrf.mxu0
      %v1211 = vpop.f32.mrf.mxu0
      %v1212 = vadd.f32 0.0, %v1211
      %v1213 = vpop.f32.mrf.mxu0
      %1214 = vmatprep.mubr.bf16.mxu0 0
      %1215 = vmatmul.mubr.bf16.gmra.mxu0 %v504
      %v1216 = vpop.f32.mrf.mxu0
      %v1217 = vadd.f32 0.0, %v1216
      %v1218 = vpop.f32.mrf.mxu0
      %v1219 = vpop.f32.mrf.mxu0
      %v1220 = vadd.f32 0.0, %v1219
      %v1221 = vpop.f32.mrf.mxu0
      %1222 = vmatprep.mubr.bf16.mxu0 0
      %1223 = vmatmul.mubr.bf16.gmra.mxu0 %v507
      %v1224 = vpop.f32.mrf.mxu0
      %v1225 = vadd.f32 0.0, %v1224
      %v1226 = vpop.f32.mrf.mxu0
      %v1227 = vpop.f32.mrf.mxu0
      %v1228 = vadd.f32 0.0, %v1227
      %v1229 = vpop.f32.mrf.mxu0
      %1230 = vmatprep.mubr.bf16.mxu0 0
      %1231 = vmatmul.mubr.bf16.gmra.mxu0 %v1169
      %v1232 = vpop.f32.mrf.mxu0
      %v1233 = vadd.f32 0.0, %v1232
      %v1234 = vpop.f32.mrf.mxu0
      %v1235 = vpop.f32.mrf.mxu0
      %v1236 = vadd.f32 0.0, %v1235
      %v1237 = vpop.f32.mrf.mxu0
      %1238 = vdwg.mxu0
      %v1239 = vadd.f32 %v1151, %v1209
      %v1240 = vadd.f32 %v1152, %v1212
      %v1241 = vadd.f32 %v1153, %v1217
      %v1242 = vadd.f32 %v1154, %v1220
      %v1243 = vadd.f32 %v1155, %v1225
      %v1244 = vadd.f32 %v1156, %v1228
      %v1245 = vadd.f32 %v1157, %v1233
      %v1246 = vadd.f32 %v1158, %v1236
      %v1247 = vrot.slane %v435, 2
      %v1248 = vrot.slane %v436, 2
      %v1249 = vsel %vm658, %v1247, %v1248
      %v1251 = vpack.c.bf16 %v1249, %v981
      %s1252 = scalar_lea.vmem %s1, 16
      %v1253 = vld [vmem:[%s1252] sm:$0x3]
      %v1255 = vsel %vm280, %v1251, 0
      %v1258 = vsel %vm509, %v1253, 0
      %1260 = vmatprep.subr.bf16.mxu0 0
      %1261 = vmatpush1.bf16.msra.mxu0 0
      %1262 = vmatprep.subr.bf16.mxu0 0
      %1263 = vmatpush1.bf16.msra.mxu0 0
      %1264 = vmatprep.subr.bf16.mxu0 0
      %1265 = vmatpush1.bf16.msra.mxu0 0
      %1266 = vmatprep.subr.bf16.mxu0 0
      %1267 = vmatpush1.bf16.msra.mxu0 0
      %1268 = vmatprep.subr.bf16.mxu0 0
      %1269 = vmatpush1.bf16.msra.mxu0 0
      %1270 = vmatprep.subr.bf16.mxu0 0
      %1271 = vmatpush1.bf16.msra.mxu0 0
      %1272 = vmatprep.subr.bf16.mxu0 0
      %1273 = vmatpush1.bf16.msra.mxu0 0
      %1274 = vmatprep.subr.bf16.mxu0 0
      %1275 = vmatpush1.bf16.msra.mxu0 %v1258
      %1276 = vmatprep.subr.bf16.mxu0 0
      %1277 = vmatpush2.bf16.msra.mxu0 0
      %1278 = vmatprep.subr.bf16.mxu0 0
      %1279 = vmatpush2.bf16.msra.mxu0 0
      %1280 = vmatprep.subr.bf16.mxu0 0
      %1281 = vmatpush2.bf16.msra.mxu0 0
      %1282 = vmatprep.subr.bf16.mxu0 0
      %1283 = vmatpush2.bf16.msra.mxu0 0
      %1284 = vmatprep.subr.bf16.mxu0 0
      %1285 = vmatpush2.bf16.msra.mxu0 0
      %1286 = vmatprep.subr.bf16.mxu0 0
      %1287 = vmatpush2.bf16.msra.mxu0 0
      %1288 = vmatprep.subr.bf16.mxu0 0
      %1289 = vmatpush2.bf16.msra.mxu0 0
      %1290 = vmatprep.subr.bf16.mxu0 0
      %1291 = vmatpush2.bf16.msra.mxu0 0
      %1292 = vmatprep.mubr.bf16.mxu0 0
      %1293 = vmatmul.mubr.bf16.gmra.mxu0 %v701
      %v1294 = vpop.f32.mrf.mxu0
      %v1295 = vadd.f32 0.0, %v1294
      %v1296 = vpop.f32.mrf.mxu0
      %v1297 = vpop.f32.mrf.mxu0
      %v1298 = vadd.f32 0.0, %v1297
      %v1299 = vpop.f32.mrf.mxu0
      %1300 = vmatprep.mubr.bf16.mxu0 0
      %1301 = vmatmul.mubr.bf16.gmra.mxu0 %v704
      %v1302 = vpop.f32.mrf.mxu0
      %v1303 = vadd.f32 0.0, %v1302
      %v1304 = vpop.f32.mrf.mxu0
      %v1305 = vpop.f32.mrf.mxu0
      %v1306 = vadd.f32 0.0, %v1305
      %v1307 = vpop.f32.mrf.mxu0
      %1308 = vmatprep.mubr.bf16.mxu0 0
      %1309 = vmatmul.mubr.bf16.gmra.mxu0 %v707
      %v1310 = vpop.f32.mrf.mxu0
      %v1311 = vadd.f32 0.0, %v1310
      %v1312 = vpop.f32.mrf.mxu0
      %v1313 = vpop.f32.mrf.mxu0
      %v1314 = vadd.f32 0.0, %v1313
      %v1315 = vpop.f32.mrf.mxu0
      %1316 = vmatprep.mubr.bf16.mxu0 0
      %1317 = vmatmul.mubr.bf16.gmra.mxu0 %v1255
      %v1318 = vpop.f32.mrf.mxu0
      %v1319 = vadd.f32 0.0, %v1318
      %v1320 = vpop.f32.mrf.mxu0
      %v1321 = vpop.f32.mrf.mxu0
      %v1322 = vadd.f32 0.0, %v1321
      %v1323 = vpop.f32.mrf.mxu0
      %1324 = vdwg.mxu0
      %v1325 = vadd.f32 %v1239, %v1295
      %v1326 = vadd.f32 %v1240, %v1298
      %v1327 = vadd.f32 %v1241, %v1303
      %v1328 = vadd.f32 %v1242, %v1306
      %v1329 = vadd.f32 %v1243, %v1311
      %v1330 = vadd.f32 %v1244, %v1314
      %v1331 = vadd.f32 %v1245, %v1319
      %v1332 = vadd.f32 %v1246, %v1322
      %v1333 = vld [vmem:[%s3] sm:$0x1]
      %v1335 = vlaneseq
      %v1336 = vshrl.u32 %v1335, 7
      %v1337 = vsub.s32 0, %v1336
      %v1338 = vrot.slane %v1333, %v1337
      %v1340 = vmul.f32 %v1325, %v1338
      %v1341 = vmul.f32 %v1326, %v1338
      %v1342 = vmul.f32 %v1327, %v1338
      %v1343 = vmul.f32 %v1328, %v1338
      %v1344 = vmul.f32 %v1329, %v1338
      %v1345 = vmul.f32 %v1330, %v1338
      %v1346 = vmul.f32 %v1331, %v1338
      %v1347 = vmul.f32 %v1332, %v1338
      %v1348 = vld [vmem:[%s4] sm:$0x1]
      %v1350 = vlaneseq
      %v1351 = vshrl.u32 %v1350, 7
      %v1352 = vsub.s32 0, %v1351
      %v1353 = vrot.slane %v1348, %v1352
      %v1355 = vadd.f32 %v1340, %v1353
      %v1356 = vadd.f32 %v1341, %v1353
      %v1357 = vadd.f32 %v1342, %v1353
      %v1358 = vadd.f32 %v1343, %v1353
      %v1359 = vadd.f32 %v1344, %v1353
      %v1360 = vadd.f32 %v1345, %v1353
      %v1361 = vadd.f32 %v1346, %v1353
      %v1362 = vadd.f32 %v1347, %v1353
      %v1363 = vmax.f32 %v1355, 0.0
      %v1364 = vmax.f32 %v1356, 0.0
      %v1365 = vmax.f32 %v1357, 0.0
      %v1366 = vmax.f32 %v1358, 0.0
      %v1367 = vmax.f32 %v1359, 0.0
      %v1368 = vmax.f32 %v1360, 0.0
      %v1369 = vmax.f32 %v1361, 0.0
      %v1370 = vmax.f32 %v1362, 0.0
      %s1371 = scalar_lea.vmem [#allocation3], 16
      %1372 = vst.msk [vmem:[%s1371 + $0x1] sm:$0xff] %vm308, %v1363
      %1373 = vst.msk [vmem:[%s1371 + $0x11] sm:$0xff] %vm308, %v1364
      %1374 = vst.msk [vmem:[%s1371 + $0x21] sm:$0xff] %vm308, %v1365
      %1375 = vst.msk [vmem:[%s1371 + $0x31] sm:$0xff] %vm308, %v1366
      %1376 = vst.msk [vmem:[%s1371 + $0x41] sm:$0xff] %vm308, %v1367
      %1377 = vst.msk [vmem:[%s1371 + $0x51] sm:$0xff] %vm308, %v1368
      %1378 = vst.msk [vmem:[%s1371 + $0x61] sm:$0xff] %vm308, %v1369
      %1379 = vst.msk [vmem:[%s1371 + $0x71] sm:$0xff] %vm308, %v1370
      %v1380 = vld [vmem:[#allocation3] sm:$0xff]
      %v1381 = vld [vmem:[#allocation3 + $0x8] sm:$0x3]
      %v1382 = vld [vmem:[#allocation3 + $0x10] sm:$0xff]
      %v1383 = vld [vmem:[#allocation3 + $0x18] sm:$0x3]
      %v1384 = vld [vmem:[#allocation3 + $0x20] sm:$0xff]
      %v1385 = vld [vmem:[#allocation3 + $0x28] sm:$0x3]
      %v1386 = vld [vmem:[#allocation3 + $0x30] sm:$0xff]
      %v1387 = vld [vmem:[#allocation3 + $0x38] sm:$0x3]
      %v1388 = vld [vmem:[#allocation3 + $0x40] sm:$0xff]
      %v1389 = vld [vmem:[#allocation3 + $0x48] sm:$0x3]
      %v1390 = vld [vmem:[#allocation3 + $0x50] sm:$0xff]
      %v1391 = vld [vmem:[#allocation3 + $0x58] sm:$0x3]
      %v1392 = vld [vmem:[#allocation3 + $0x60] sm:$0xff]
      %v1393 = vld [vmem:[#allocation3 + $0x68] sm:$0x3]
      %v1394 = vld [vmem:[#allocation3 + $0x70] sm:$0xff]
      %v1395 = vld [vmem:[#allocation3 + $0x78] sm:$0x3]
      %v1396 = vld [vmem:[#allocation3 + $0x80] sm:$0xff]
      %v1397 = vld [vmem:[#allocation3 + $0x88] sm:$0x3]
      %v1398 = vld [vmem:[#allocation3 + $0x90] sm:$0xff]
      %v1399 = vld [vmem:[#allocation3 + $0x98] sm:$0x3]
      %v1400 = vpack.c.bf16 %v1382, %v1380
      %v1401 = vpack.c.bf16 %v1386, %v1384
      %v1402 = vpack.c.bf16 %v1390, %v1388
      %v1403 = vpack.c.bf16 %v1394, %v1392
      %v1404 = vld [vmem:[%s2] sm:$0xf]
      %v1421 = vrot.slane %v1380, 1
      %v1422 = vrot.slane %v1381, 1
      %v1423 = vsel %vm458, %v1421, %v1422
      %v1424 = vrot.slane %v1382, 1
      %v1425 = vrot.slane %v1383, 1
      %v1426 = vsel %vm458, %v1424, %v1425
      %v1427 = vrot.slane %v1384, 1
      %v1428 = vrot.slane %v1385, 1
      %v1429 = vsel %vm458, %v1427, %v1428
      %v1430 = vrot.slane %v1386, 1
      %v1431 = vrot.slane %v1387, 1
      %v1432 = vsel %vm458, %v1430, %v1431
      %v1433 = vrot.slane %v1388, 1
      %v1434 = vrot.slane %v1389, 1
      %v1435 = vsel %vm458, %v1433, %v1434
      %v1436 = vrot.slane %v1390, 1
      %v1437 = vrot.slane %v1391, 1
      %v1438 = vsel %vm458, %v1436, %v1437
      %v1439 = vrot.slane %v1392, 1
      %v1440 = vrot.slane %v1393, 1
      %v1441 = vsel %vm458, %v1439, %v1440
      %v1442 = vrot.slane %v1394, 1
      %v1443 = vrot.slane %v1395, 1
      %v1444 = vsel %vm458, %v1442, %v1443
      %v1453 = vpack.c.bf16 %v1426, %v1423
      %v1454 = vpack.c.bf16 %v1432, %v1429
      %v1455 = vpack.c.bf16 %v1438, %v1435
      %v1456 = vpack.c.bf16 %v1444, %v1441
      %s1457 = scalar_lea.vmem %s2, 4
      %v1458 = vld [vmem:[%s1457] sm:$0xf]
      %v1460 = vsel %vm308, %v1453, 0
      %v1463 = vsel %vm308, %v1454, 0
      %v1466 = vsel %vm308, %v1455, 0
      %v1469 = vsel %vm308, %v1456, 0
      %vm1471 = vcmask 1043456
      %v1473 = vsel %vm1471, %v1458, 0
      %1475 = vmatprep.subr.bf16.mxu0 0
      %1476 = vmatpush1.bf16.msra.mxu0 0
      %1477 = vmatprep.subr.bf16.mxu0 0
      %1478 = vmatpush1.bf16.msra.mxu0 0
      %1479 = vmatprep.subr.bf16.mxu0 0
      %1480 = vmatpush1.bf16.msra.mxu0 0
      %1481 = vmatprep.subr.bf16.mxu0 0
      %1482 = vmatpush1.bf16.msra.mxu0 0
      %1483 = vmatprep.subr.bf16.mxu0 0
      %1484 = vmatpush1.bf16.msra.mxu0 0
      %1485 = vmatprep.subr.bf16.mxu0 0
      %1486 = vmatpush1.bf16.msra.mxu0 0
      %1487 = vmatprep.subr.bf16.mxu0 0
      %1488 = vmatpush1.bf16.msra.mxu0 0
      %1489 = vmatprep.subr.bf16.mxu0 0
      %1490 = vmatpush1.bf16.msra.mxu0 %v1473
      %1491 = vmatprep.subr.bf16.mxu0 0
      %1492 = vmatpush2.bf16.msra.mxu0 0
      %1493 = vmatprep.subr.bf16.mxu0 0
      %1494 = vmatpush2.bf16.msra.mxu0 0
      %1495 = vmatprep.subr.bf16.mxu0 0
      %1496 = vmatpush2.bf16.msra.mxu0 0
      %1497 = vmatprep.subr.bf16.mxu0 0
      %1498 = vmatpush2.bf16.msra.mxu0 0
      %1499 = vmatprep.subr.bf16.mxu0 0
      %1500 = vmatpush2.bf16.msra.mxu0 0
      %1501 = vmatprep.subr.bf16.mxu0 0
      %1502 = vmatpush2.bf16.msra.mxu0 0
      %1503 = vmatprep.subr.bf16.mxu0 0
      %1504 = vmatpush2.bf16.msra.mxu0 0
      %1505 = vmatprep.subr.bf16.mxu0 0
      %1506 = vmatpush2.bf16.msra.mxu0 0
      %1507 = vmatprep.mubr.bf16.mxu0 0
      %1508 = vmatmul.mubr.bf16.gmra.mxu0 %v1460
      %v1509 = vpop.f32.mrf.mxu0
      %v1510 = vadd.f32 0.0, %v1509
      %v1511 = vpop.f32.mrf.mxu0
      %v1512 = vpop.f32.mrf.mxu0
      %v1513 = vadd.f32 0.0, %v1512
      %v1514 = vpop.f32.mrf.mxu0
      %1515 = vmatprep.mubr.bf16.mxu0 0
      %1516 = vmatmul.mubr.bf16.gmra.mxu0 %v1463
      %v1517 = vpop.f32.mrf.mxu0
      %v1518 = vadd.f32 0.0, %v1517
      %v1519 = vpop.f32.mrf.mxu0
      %v1520 = vpop.f32.mrf.mxu0
      %v1521 = vadd.f32 0.0, %v1520
      %v1522 = vpop.f32.mrf.mxu0
      %1523 = vmatprep.mubr.bf16.mxu0 0
      %1524 = vmatmul.mubr.bf16.gmra.mxu0 %v1466
      %v1525 = vpop.f32.mrf.mxu0
      %v1526 = vadd.f32 0.0, %v1525
      %v1527 = vpop.f32.mrf.mxu0
      %v1528 = vpop.f32.mrf.mxu0
      %v1529 = vadd.f32 0.0, %v1528
      %v1530 = vpop.f32.mrf.mxu0
      %1531 = vmatprep.mubr.bf16.mxu0 0
      %1532 = vmatmul.mubr.bf16.gmra.mxu0 %v1469
      %v1533 = vpop.f32.mrf.mxu0
      %v1534 = vadd.f32 0.0, %v1533
      %v1535 = vpop.f32.mrf.mxu0
      %v1536 = vpop.f32.mrf.mxu0
      %v1537 = vadd.f32 0.0, %v1536
      %v1538 = vpop.f32.mrf.mxu0
      %1539 = vdwg.mxu0
      %v1541 = vsel %vm308, %v1400, 0
      %v1544 = vsel %vm308, %v1401, 0
      %v1547 = vsel %vm308, %v1402, 0
      %v1550 = vsel %vm308, %v1403, 0
      %v1553 = vsel %vm1471, %v1404, 0
      %1555 = vmatprep.subr.bf16.mxu0 0
      %1556 = vmatpush1.bf16.msra.mxu0 0
      %1557 = vmatprep.subr.bf16.mxu0 0
      %1558 = vmatpush1.bf16.msra.mxu0 0
      %1559 = vmatprep.subr.bf16.mxu0 0
      %1560 = vmatpush1.bf16.msra.mxu0 0
      %1561 = vmatprep.subr.bf16.mxu0 0
      %1562 = vmatpush1.bf16.msra.mxu0 0
      %1563 = vmatprep.subr.bf16.mxu0 0
      %1564 = vmatpush1.bf16.msra.mxu0 0
      %1565 = vmatprep.subr.bf16.mxu0 0
      %1566 = vmatpush1.bf16.msra.mxu0 0
      %1567 = vmatprep.subr.bf16.mxu0 0
      %1568 = vmatpush1.bf16.msra.mxu0 0
      %1569 = vmatprep.subr.bf16.mxu0 0
      %1570 = vmatpush1.bf16.msra.mxu0 %v1553
      %1571 = vmatprep.subr.bf16.mxu0 0
      %1572 = vmatpush2.bf16.msra.mxu0 0
      %1573 = vmatprep.subr.bf16.mxu0 0
      %1574 = vmatpush2.bf16.msra.mxu0 0
      %1575 = vmatprep.subr.bf16.mxu0 0
      %1576 = vmatpush2.bf16.msra.mxu0 0
      %1577 = vmatprep.subr.bf16.mxu0 0
      %1578 = vmatpush2.bf16.msra.mxu0 0
      %1579 = vmatprep.subr.bf16.mxu0 0
      %1580 = vmatpush2.bf16.msra.mxu0 0
      %1581 = vmatprep.subr.bf16.mxu0 0
      %1582 = vmatpush2.bf16.msra.mxu0 0
      %1583 = vmatprep.subr.bf16.mxu0 0
      %1584 = vmatpush2.bf16.msra.mxu0 0
      %1585 = vmatprep.subr.bf16.mxu0 0
      %1586 = vmatpush2.bf16.msra.mxu0 0
      %1587 = vmatprep.mubr.bf16.mxu0 0
      %1588 = vmatmul.mubr.bf16.gmra.mxu0 %v1541
      %v1589 = vpop.f32.mrf.mxu0
      %v1590 = vadd.f32 %v1510, %v1589
      %v1591 = vpop.f32.mrf.mxu0
      %v1592 = vpop.f32.mrf.mxu0
      %v1593 = vadd.f32 %v1513, %v1592
      %v1594 = vpop.f32.mrf.mxu0
      %1595 = vmatprep.mubr.bf16.mxu0 0
      %1596 = vmatmul.mubr.bf16.gmra.mxu0 %v1544
      %v1597 = vpop.f32.mrf.mxu0
      %v1598 = vadd.f32 %v1518, %v1597
      %v1599 = vpop.f32.mrf.mxu0
      %v1600 = vpop.f32.mrf.mxu0
      %v1601 = vadd.f32 %v1521, %v1600
      %v1602 = vpop.f32.mrf.mxu0
      %1603 = vmatprep.mubr.bf16.mxu0 0
      %1604 = vmatmul.mubr.bf16.gmra.mxu0 %v1547
      %v1605 = vpop.f32.mrf.mxu0
      %v1606 = vadd.f32 %v1526, %v1605
      %v1607 = vpop.f32.mrf.mxu0
      %v1608 = vpop.f32.mrf.mxu0
      %v1609 = vadd.f32 %v1529, %v1608
      %v1610 = vpop.f32.mrf.mxu0
      %1611 = vmatprep.mubr.bf16.mxu0 0
      %1612 = vmatmul.mubr.bf16.gmra.mxu0 %v1550
      %v1613 = vpop.f32.mrf.mxu0
      %v1614 = vadd.f32 %v1534, %v1613
      %v1615 = vpop.f32.mrf.mxu0
      %v1616 = vpop.f32.mrf.mxu0
      %v1617 = vadd.f32 %v1537, %v1616
      %v1618 = vpop.f32.mrf.mxu0
      %1619 = vdwg.mxu0
      %v1620 = vrot.slane %v1380, 2
      %v1621 = vrot.slane %v1381, 2
      %v1622 = vsel %vm658, %v1620, %v1621
      %v1623 = vrot.slane %v1382, 2
      %v1624 = vrot.slane %v1383, 2
      %v1625 = vsel %vm658, %v1623, %v1624
      %v1626 = vrot.slane %v1384, 2
      %v1627 = vrot.slane %v1385, 2
      %v1628 = vsel %vm658, %v1626, %v1627
      %v1629 = vrot.slane %v1386, 2
      %v1630 = vrot.slane %v1387, 2
      %v1631 = vsel %vm658, %v1629, %v1630
      %v1632 = vrot.slane %v1388, 2
      %v1633 = vrot.slane %v1389, 2
      %v1634 = vsel %vm658, %v1632, %v1633
      %v1635 = vrot.slane %v1390, 2
      %v1636 = vrot.slane %v1391, 2
      %v1637 = vsel %vm658, %v1635, %v1636
      %v1638 = vrot.slane %v1392, 2
      %v1639 = vrot.slane %v1393, 2
      %v1640 = vsel %vm658, %v1638, %v1639
      %v1641 = vrot.slane %v1394, 2
      %v1642 = vrot.slane %v1395, 2
      %v1643 = vsel %vm658, %v1641, %v1642
      %v1652 = vpack.c.bf16 %v1625, %v1622
      %v1653 = vpack.c.bf16 %v1631, %v1628
      %v1654 = vpack.c.bf16 %v1637, %v1634
      %v1655 = vpack.c.bf16 %v1643, %v1640
      %s1656 = scalar_lea.vmem %s2, 8
      %v1657 = vld [vmem:[%s1656] sm:$0xf]
      %v1659 = vsel %vm308, %v1652, 0
      %v1662 = vsel %vm308, %v1653, 0
      %v1665 = vsel %vm308, %v1654, 0
      %v1668 = vsel %vm308, %v1655, 0
      %v1671 = vsel %vm1471, %v1657, 0
      %1673 = vmatprep.subr.bf16.mxu0 0
      %1674 = vmatpush1.bf16.msra.mxu0 0
      %1675 = vmatprep.subr.bf16.mxu0 0
      %1676 = vmatpush1.bf16.msra.mxu0 0
      %1677 = vmatprep.subr.bf16.mxu0 0
      %1678 = vmatpush1.bf16.msra.mxu0 0
      %1679 = vmatprep.subr.bf16.mxu0 0
      %1680 = vmatpush1.bf16.msra.mxu0 0
      %1681 = vmatprep.subr.bf16.mxu0 0
      %1682 = vmatpush1.bf16.msra.mxu0 0
      %1683 = vmatprep.subr.bf16.mxu0 0
      %1684 = vmatpush1.bf16.msra.mxu0 0
      %1685 = vmatprep.subr.bf16.mxu0 0
      %1686 = vmatpush1.bf16.msra.mxu0 0
      %1687 = vmatprep.subr.bf16.mxu0 0
      %1688 = vmatpush1.bf16.msra.mxu0 %v1671
      %1689 = vmatprep.subr.bf16.mxu0 0
      %1690 = vmatpush2.bf16.msra.mxu0 0
      %1691 = vmatprep.subr.bf16.mxu0 0
      %1692 = vmatpush2.bf16.msra.mxu0 0
      %1693 = vmatprep.subr.bf16.mxu0 0
      %1694 = vmatpush2.bf16.msra.mxu0 0
      %1695 = vmatprep.subr.bf16.mxu0 0
      %1696 = vmatpush2.bf16.msra.mxu0 0
      %1697 = vmatprep.subr.bf16.mxu0 0
      %1698 = vmatpush2.bf16.msra.mxu0 0
      %1699 = vmatprep.subr.bf16.mxu0 0
      %1700 = vmatpush2.bf16.msra.mxu0 0
      %1701 = vmatprep.subr.bf16.mxu0 0
      %1702 = vmatpush2.bf16.msra.mxu0 0
      %1703 = vmatprep.subr.bf16.mxu0 0
      %1704 = vmatpush2.bf16.msra.mxu0 0
      %1705 = vmatprep.mubr.bf16.mxu0 0
      %1706 = vmatmul.mubr.bf16.gmra.mxu0 %v1659
      %v1707 = vpop.f32.mrf.mxu0
      %v1708 = vadd.f32 0.0, %v1707
      %v1709 = vpop.f32.mrf.mxu0
      %v1710 = vpop.f32.mrf.mxu0
      %v1711 = vadd.f32 0.0, %v1710
      %v1712 = vpop.f32.mrf.mxu0
      %1713 = vmatprep.mubr.bf16.mxu0 0
      %1714 = vmatmul.mubr.bf16.gmra.mxu0 %v1662
      %v1715 = vpop.f32.mrf.mxu0
      %v1716 = vadd.f32 0.0, %v1715
      %v1717 = vpop.f32.mrf.mxu0
      %v1718 = vpop.f32.mrf.mxu0
      %v1719 = vadd.f32 0.0, %v1718
      %v1720 = vpop.f32.mrf.mxu0
      %1721 = vmatprep.mubr.bf16.mxu0 0
      %1722 = vmatmul.mubr.bf16.gmra.mxu0 %v1665
      %v1723 = vpop.f32.mrf.mxu0
      %v1724 = vadd.f32 0.0, %v1723
      %v1725 = vpop.f32.mrf.mxu0
      %v1726 = vpop.f32.mrf.mxu0
      %v1727 = vadd.f32 0.0, %v1726
      %v1728 = vpop.f32.mrf.mxu0
      %1729 = vmatprep.mubr.bf16.mxu0 0
      %1730 = vmatmul.mubr.bf16.gmra.mxu0 %v1668
      %v1731 = vpop.f32.mrf.mxu0
      %v1732 = vadd.f32 0.0, %v1731
      %v1733 = vpop.f32.mrf.mxu0
      %v1734 = vpop.f32.mrf.mxu0
      %v1735 = vadd.f32 0.0, %v1734
      %v1736 = vpop.f32.mrf.mxu0
      %1737 = vdwg.mxu0
      %v1738 = vadd.f32 %v1590, %v1708
      %v1739 = vadd.f32 %v1593, %v1711
      %v1740 = vadd.f32 %v1598, %v1716
      %v1741 = vadd.f32 %v1601, %v1719
      %v1742 = vadd.f32 %v1606, %v1724
      %v1743 = vadd.f32 %v1609, %v1727
      %v1744 = vadd.f32 %v1614, %v1732
      %v1745 = vadd.f32 %v1617, %v1735
      %v1746 = vpack.c.bf16 %v1384, %v1382
      %v1747 = vpack.c.bf16 %v1388, %v1386
      %v1748 = vpack.c.bf16 %v1392, %v1390
      %v1749 = vpack.c.bf16 %v1396, %v1394
      %s1750 = scalar_lea.vmem %s2, 12
      %v1751 = vld [vmem:[%s1750] sm:$0xf]
      %v1753 = vsel %vm308, %v1746, 0
      %v1756 = vsel %vm308, %v1747, 0
      %v1759 = vsel %vm308, %v1748, 0
      %v1762 = vsel %vm308, %v1749, 0
      %v1765 = vsel %vm1471, %v1751, 0
      %1767 = vmatprep.subr.bf16.mxu0 0
      %1768 = vmatpush1.bf16.msra.mxu0 0
      %1769 = vmatprep.subr.bf16.mxu0 0
      %1770 = vmatpush1.bf16.msra.mxu0 0
      %1771 = vmatprep.subr.bf16.mxu0 0
      %1772 = vmatpush1.bf16.msra.mxu0 0
      %1773 = vmatprep.subr.bf16.mxu0 0
      %1774 = vmatpush1.bf16.msra.mxu0 0
      %1775 = vmatprep.subr.bf16.mxu0 0
      %1776 = vmatpush1.bf16.msra.mxu0 0
      %1777 = vmatprep.subr.bf16.mxu0 0
      %1778 = vmatpush1.bf16.msra.mxu0 0
      %1779 = vmatprep.subr.bf16.mxu0 0
      %1780 = vmatpush1.bf16.msra.mxu0 0
      %1781 = vmatprep.subr.bf16.mxu0 0
      %1782 = vmatpush1.bf16.msra.mxu0 %v1765
      %1783 = vmatprep.subr.bf16.mxu0 0
      %1784 = vmatpush2.bf16.msra.mxu0 0
      %1785 = vmatprep.subr.bf16.mxu0 0
      %1786 = vmatpush2.bf16.msra.mxu0 0
      %1787 = vmatprep.subr.bf16.mxu0 0
      %1788 = vmatpush2.bf16.msra.mxu0 0
      %1789 = vmatprep.subr.bf16.mxu0 0
      %1790 = vmatpush2.bf16.msra.mxu0 0
      %1791 = vmatprep.subr.bf16.mxu0 0
      %1792 = vmatpush2.bf16.msra.mxu0 0
      %1793 = vmatprep.subr.bf16.mxu0 0
      %1794 = vmatpush2.bf16.msra.mxu0 0
      %1795 = vmatprep.subr.bf16.mxu0 0
      %1796 = vmatpush2.bf16.msra.mxu0 0
      %1797 = vmatprep.subr.bf16.mxu0 0
      %1798 = vmatpush2.bf16.msra.mxu0 0
      %1799 = vmatprep.mubr.bf16.mxu0 0
      %1800 = vmatmul.mubr.bf16.gmra.mxu0 %v1753
      %v1801 = vpop.f32.mrf.mxu0
      %v1802 = vadd.f32 0.0, %v1801
      %v1803 = vpop.f32.mrf.mxu0
      %v1804 = vpop.f32.mrf.mxu0
      %v1805 = vadd.f32 0.0, %v1804
      %v1806 = vpop.f32.mrf.mxu0
      %1807 = vmatprep.mubr.bf16.mxu0 0
      %1808 = vmatmul.mubr.bf16.gmra.mxu0 %v1756
      %v1809 = vpop.f32.mrf.mxu0
      %v1810 = vadd.f32 0.0, %v1809
      %v1811 = vpop.f32.mrf.mxu0
      %v1812 = vpop.f32.mrf.mxu0
      %v1813 = vadd.f32 0.0, %v1812
      %v1814 = vpop.f32.mrf.mxu0
      %1815 = vmatprep.mubr.bf16.mxu0 0
      %1816 = vmatmul.mubr.bf16.gmra.mxu0 %v1759
      %v1817 = vpop.f32.mrf.mxu0
      %v1818 = vadd.f32 0.0, %v1817
      %v1819 = vpop.f32.mrf.mxu0
      %v1820 = vpop.f32.mrf.mxu0
      %v1821 = vadd.f32 0.0, %v1820
      %v1822 = vpop.f32.mrf.mxu0
      %1823 = vmatprep.mubr.bf16.mxu0 0
      %1824 = vmatmul.mubr.bf16.gmra.mxu0 %v1762
      %v1825 = vpop.f32.mrf.mxu0
      %v1826 = vadd.f32 0.0, %v1825
      %v1827 = vpop.f32.mrf.mxu0
      %v1828 = vpop.f32.mrf.mxu0
      %v1829 = vadd.f32 0.0, %v1828
      %v1830 = vpop.f32.mrf.mxu0
      %1831 = vdwg.mxu0
      %v1832 = vadd.f32 %v1738, %v1802
      %v1833 = vadd.f32 %v1739, %v1805
      %v1834 = vadd.f32 %v1740, %v1810
      %v1835 = vadd.f32 %v1741, %v1813
      %v1836 = vadd.f32 %v1742, %v1818
      %v1837 = vadd.f32 %v1743, %v1821
      %v1838 = vadd.f32 %v1744, %v1826
      %v1839 = vadd.f32 %v1745, %v1829
      %v1842 = vrot.slane %v1396, 1
      %v1843 = vrot.slane %v1397, 1
      %v1844 = vsel %vm458, %v1842, %v1843
      %v1846 = vpack.c.bf16 %v1429, %v1426
      %v1847 = vpack.c.bf16 %v1435, %v1432
      %v1848 = vpack.c.bf16 %v1441, %v1438
      %v1849 = vpack.c.bf16 %v1844, %v1444
      %s1850 = scalar_lea.vmem %s2, 16
      %v1851 = vld [vmem:[%s1850] sm:$0xf]
      %v1853 = vsel %vm308, %v1846, 0
      %v1856 = vsel %vm308, %v1847, 0
      %v1859 = vsel %vm308, %v1848, 0
      %v1862 = vsel %vm308, %v1849, 0
      %v1865 = vsel %vm1471, %v1851, 0
      %1867 = vmatprep.subr.bf16.mxu0 0
      %1868 = vmatpush1.bf16.msra.mxu0 0
      %1869 = vmatprep.subr.bf16.mxu0 0
      %1870 = vmatpush1.bf16.msra.mxu0 0
      %1871 = vmatprep.subr.bf16.mxu0 0
      %1872 = vmatpush1.bf16.msra.mxu0 0
      %1873 = vmatprep.subr.bf16.mxu0 0
      %1874 = vmatpush1.bf16.msra.mxu0 0
      %1875 = vmatprep.subr.bf16.mxu0 0
      %1876 = vmatpush1.bf16.msra.mxu0 0
      %1877 = vmatprep.subr.bf16.mxu0 0
      %1878 = vmatpush1.bf16.msra.mxu0 0
      %1879 = vmatprep.subr.bf16.mxu0 0
      %1880 = vmatpush1.bf16.msra.mxu0 0
      %1881 = vmatprep.subr.bf16.mxu0 0
      %1882 = vmatpush1.bf16.msra.mxu0 %v1865
      %1883 = vmatprep.subr.bf16.mxu0 0
      %1884 = vmatpush2.bf16.msra.mxu0 0
      %1885 = vmatprep.subr.bf16.mxu0 0
      %1886 = vmatpush2.bf16.msra.mxu0 0
      %1887 = vmatprep.subr.bf16.mxu0 0
      %1888 = vmatpush2.bf16.msra.mxu0 0
      %1889 = vmatprep.subr.bf16.mxu0 0
      %1890 = vmatpush2.bf16.msra.mxu0 0
      %1891 = vmatprep.subr.bf16.mxu0 0
      %1892 = vmatpush2.bf16.msra.mxu0 0
      %1893 = vmatprep.subr.bf16.mxu0 0
      %1894 = vmatpush2.bf16.msra.mxu0 0
      %1895 = vmatprep.subr.bf16.mxu0 0
      %1896 = vmatpush2.bf16.msra.mxu0 0
      %1897 = vmatprep.subr.bf16.mxu0 0
      %1898 = vmatpush2.bf16.msra.mxu0 0
      %1899 = vmatprep.mubr.bf16.mxu0 0
      %1900 = vmatmul.mubr.bf16.gmra.mxu0 %v1853
      %v1901 = vpop.f32.mrf.mxu0
      %v1902 = vadd.f32 0.0, %v1901
      %v1903 = vpop.f32.mrf.mxu0
      %v1904 = vpop.f32.mrf.mxu0
      %v1905 = vadd.f32 0.0, %v1904
      %v1906 = vpop.f32.mrf.mxu0
      %1907 = vmatprep.mubr.bf16.mxu0 0
      %1908 = vmatmul.mubr.bf16.gmra.mxu0 %v1856
      %v1909 = vpop.f32.mrf.mxu0
      %v1910 = vadd.f32 0.0, %v1909
      %v1911 = vpop.f32.mrf.mxu0
      %v1912 = vpop.f32.mrf.mxu0
      %v1913 = vadd.f32 0.0, %v1912
      %v1914 = vpop.f32.mrf.mxu0
      %1915 = vmatprep.mubr.bf16.mxu0 0
      %1916 = vmatmul.mubr.bf16.gmra.mxu0 %v1859
      %v1917 = vpop.f32.mrf.mxu0
      %v1918 = vadd.f32 0.0, %v1917
      %v1919 = vpop.f32.mrf.mxu0
      %v1920 = vpop.f32.mrf.mxu0
      %v1921 = vadd.f32 0.0, %v1920
      %v1922 = vpop.f32.mrf.mxu0
      %1923 = vmatprep.mubr.bf16.mxu0 0
      %1924 = vmatmul.mubr.bf16.gmra.mxu0 %v1862
      %v1925 = vpop.f32.mrf.mxu0
      %v1926 = vadd.f32 0.0, %v1925
      %v1927 = vpop.f32.mrf.mxu0
      %v1928 = vpop.f32.mrf.mxu0
      %v1929 = vadd.f32 0.0, %v1928
      %v1930 = vpop.f32.mrf.mxu0
      %1931 = vdwg.mxu0
      %v1932 = vadd.f32 %v1832, %v1902
      %v1933 = vadd.f32 %v1833, %v1905
      %v1934 = vadd.f32 %v1834, %v1910
      %v1935 = vadd.f32 %v1835, %v1913
      %v1936 = vadd.f32 %v1836, %v1918
      %v1937 = vadd.f32 %v1837, %v1921
      %v1938 = vadd.f32 %v1838, %v1926
      %v1939 = vadd.f32 %v1839, %v1929
      %v1940 = vrot.slane %v1396, 2
      %v1941 = vrot.slane %v1397, 2
      %v1942 = vsel %vm658, %v1940, %v1941
      %v1944 = vpack.c.bf16 %v1628, %v1625
      %v1945 = vpack.c.bf16 %v1634, %v1631
      %v1946 = vpack.c.bf16 %v1640, %v1637
      %v1947 = vpack.c.bf16 %v1942, %v1643
      %s1948 = scalar_lea.vmem %s2, 20
      %v1949 = vld [vmem:[%s1948] sm:$0xf]
      %v1951 = vsel %vm308, %v1944, 0
      %v1954 = vsel %vm308, %v1945, 0
      %v1957 = vsel %vm308, %v1946, 0
      %v1960 = vsel %vm308, %v1947, 0
      %v1963 = vsel %vm1471, %v1949, 0
      %1965 = vmatprep.subr.bf16.mxu0 0
      %1966 = vmatpush1.bf16.msra.mxu0 0
      %1967 = vmatprep.subr.bf16.mxu0 0
      %1968 = vmatpush1.bf16.msra.mxu0 0
      %1969 = vmatprep.subr.bf16.mxu0 0
      %1970 = vmatpush1.bf16.msra.mxu0 0
      %1971 = vmatprep.subr.bf16.mxu0 0
      %1972 = vmatpush1.bf16.msra.mxu0 0
      %1973 = vmatprep.subr.bf16.mxu0 0
      %1974 = vmatpush1.bf16.msra.mxu0 0
      %1975 = vmatprep.subr.bf16.mxu0 0
      %1976 = vmatpush1.bf16.msra.mxu0 0
      %1977 = vmatprep.subr.bf16.mxu0 0
      %1978 = vmatpush1.bf16.msra.mxu0 0
      %1979 = vmatprep.subr.bf16.mxu0 0
      %1980 = vmatpush1.bf16.msra.mxu0 %v1963
      %1981 = vmatprep.subr.bf16.mxu0 0
      %1982 = vmatpush2.bf16.msra.mxu0 0
      %1983 = vmatprep.subr.bf16.mxu0 0
      %1984 = vmatpush2.bf16.msra.mxu0 0
      %1985 = vmatprep.subr.bf16.mxu0 0
      %1986 = vmatpush2.bf16.msra.mxu0 0
      %1987 = vmatprep.subr.bf16.mxu0 0
      %1988 = vmatpush2.bf16.msra.mxu0 0
      %1989 = vmatprep.subr.bf16.mxu0 0
      %1990 = vmatpush2.bf16.msra.mxu0 0
      %1991 = vmatprep.subr.bf16.mxu0 0
      %1992 = vmatpush2.bf16.msra.mxu0 0
      %1993 = vmatprep.subr.bf16.mxu0 0
      %1994 = vmatpush2.bf16.msra.mxu0 0
      %1995 = vmatprep.subr.bf16.mxu0 0
      %1996 = vmatpush2.bf16.msra.mxu0 0
      %1997 = vmatprep.mubr.bf16.mxu0 0
      %1998 = vmatmul.mubr.bf16.gmra.mxu0 %v1951
      %v1999 = vpop.f32.mrf.mxu0
      %v2000 = vadd.f32 0.0, %v1999
      %v2001 = vpop.f32.mrf.mxu0
      %v2002 = vpop.f32.mrf.mxu0
      %v2003 = vadd.f32 0.0, %v2002
      %v2004 = vpop.f32.mrf.mxu0
      %2005 = vmatprep.mubr.bf16.mxu0 0
      %2006 = vmatmul.mubr.bf16.gmra.mxu0 %v1954
      %v2007 = vpop.f32.mrf.mxu0
      %v2008 = vadd.f32 0.0, %v2007
      %v2009 = vpop.f32.mrf.mxu0
      %v2010 = vpop.f32.mrf.mxu0
      %v2011 = vadd.f32 0.0, %v2010
      %v2012 = vpop.f32.mrf.mxu0
      %2013 = vmatprep.mubr.bf16.mxu0 0
      %2014 = vmatmul.mubr.bf16.gmra.mxu0 %v1957
      %v2015 = vpop.f32.mrf.mxu0
      %v2016 = vadd.f32 0.0, %v2015
      %v2017 = vpop.f32.mrf.mxu0
      %v2018 = vpop.f32.mrf.mxu0
      %v2019 = vadd.f32 0.0, %v2018
      %v2020 = vpop.f32.mrf.mxu0
      %2021 = vmatprep.mubr.bf16.mxu0 0
      %2022 = vmatmul.mubr.bf16.gmra.mxu0 %v1960
      %v2023 = vpop.f32.mrf.mxu0
      %v2024 = vadd.f32 0.0, %v2023
      %v2025 = vpop.f32.mrf.mxu0
      %v2026 = vpop.f32.mrf.mxu0
      %v2027 = vadd.f32 0.0, %v2026
      %v2028 = vpop.f32.mrf.mxu0
      %2029 = vdwg.mxu0
      %v2030 = vadd.f32 %v1932, %v2000
      %v2031 = vadd.f32 %v1933, %v2003
      %v2032 = vadd.f32 %v1934, %v2008
      %v2033 = vadd.f32 %v1935, %v2011
      %v2034 = vadd.f32 %v1936, %v2016
      %v2035 = vadd.f32 %v1937, %v2019
      %v2036 = vadd.f32 %v1938, %v2024
      %v2037 = vadd.f32 %v1939, %v2027
      %v2038 = vpack.c.bf16 %v1398, %v1396
      %s2039 = scalar_lea.vmem %s2, 24
      %v2040 = vld [vmem:[%s2039] sm:$0xf]
      %v2042 = vsel %vm308, %v2038, 0
      %v2045 = vsel %vm1471, %v2040, 0
      %2047 = vmatprep.subr.bf16.mxu0 0
      %2048 = vmatpush1.bf16.msra.mxu0 0
      %2049 = vmatprep.subr.bf16.mxu0 0
      %2050 = vmatpush1.bf16.msra.mxu0 0
      %2051 = vmatprep.subr.bf16.mxu0 0
      %2052 = vmatpush1.bf16.msra.mxu0 0
      %2053 = vmatprep.subr.bf16.mxu0 0
      %2054 = vmatpush1.bf16.msra.mxu0 0
      %2055 = vmatprep.subr.bf16.mxu0 0
      %2056 = vmatpush1.bf16.msra.mxu0 0
      %2057 = vmatprep.subr.bf16.mxu0 0
      %2058 = vmatpush1.bf16.msra.mxu0 0
      %2059 = vmatprep.subr.bf16.mxu0 0
      %2060 = vmatpush1.bf16.msra.mxu0 0
      %2061 = vmatprep.subr.bf16.mxu0 0
      %2062 = vmatpush1.bf16.msra.mxu0 %v2045
      %2063 = vmatprep.subr.bf16.mxu0 0
      %2064 = vmatpush2.bf16.msra.mxu0 0
      %2065 = vmatprep.subr.bf16.mxu0 0
      %2066 = vmatpush2.bf16.msra.mxu0 0
      %2067 = vmatprep.subr.bf16.mxu0 0
      %2068 = vmatpush2.bf16.msra.mxu0 0
      %2069 = vmatprep.subr.bf16.mxu0 0
      %2070 = vmatpush2.bf16.msra.mxu0 0
      %2071 = vmatprep.subr.bf16.mxu0 0
      %2072 = vmatpush2.bf16.msra.mxu0 0
      %2073 = vmatprep.subr.bf16.mxu0 0
      %2074 = vmatpush2.bf16.msra.mxu0 0
      %2075 = vmatprep.subr.bf16.mxu0 0
      %2076 = vmatpush2.bf16.msra.mxu0 0
      %2077 = vmatprep.subr.bf16.mxu0 0
      %2078 = vmatpush2.bf16.msra.mxu0 0
      %2079 = vmatprep.mubr.bf16.mxu0 0
      %2080 = vmatmul.mubr.bf16.gmra.mxu0 %v1544
      %v2081 = vpop.f32.mrf.mxu0
      %v2082 = vadd.f32 0.0, %v2081
      %v2083 = vpop.f32.mrf.mxu0
      %v2084 = vpop.f32.mrf.mxu0
      %v2085 = vadd.f32 0.0, %v2084
      %v2086 = vpop.f32.mrf.mxu0
      %2087 = vmatprep.mubr.bf16.mxu0 0
      %2088 = vmatmul.mubr.bf16.gmra.mxu0 %v1547
      %v2089 = vpop.f32.mrf.mxu0
      %v2090 = vadd.f32 0.0, %v2089
      %v2091 = vpop.f32.mrf.mxu0
      %v2092 = vpop.f32.mrf.mxu0
      %v2093 = vadd.f32 0.0, %v2092
      %v2094 = vpop.f32.mrf.mxu0
      %2095 = vmatprep.mubr.bf16.mxu0 0
      %2096 = vmatmul.mubr.bf16.gmra.mxu0 %v1550
      %v2097 = vpop.f32.mrf.mxu0
      %v2098 = vadd.f32 0.0, %v2097
      %v2099 = vpop.f32.mrf.mxu0
      %v2100 = vpop.f32.mrf.mxu0
      %v2101 = vadd.f32 0.0, %v2100
      %v2102 = vpop.f32.mrf.mxu0
      %2103 = vmatprep.mubr.bf16.mxu0 0
      %2104 = vmatmul.mubr.bf16.gmra.mxu0 %v2042
      %v2105 = vpop.f32.mrf.mxu0
      %v2106 = vadd.f32 0.0, %v2105
      %v2107 = vpop.f32.mrf.mxu0
      %v2108 = vpop.f32.mrf.mxu0
      %v2109 = vadd.f32 0.0, %v2108
      %v2110 = vpop.f32.mrf.mxu0
      %2111 = vdwg.mxu0
      %v2112 = vadd.f32 %v2030, %v2082
      %v2113 = vadd.f32 %v2031, %v2085
      %v2114 = vadd.f32 %v2032, %v2090
      %v2115 = vadd.f32 %v2033, %v2093
      %v2116 = vadd.f32 %v2034, %v2098
      %v2117 = vadd.f32 %v2035, %v2101
      %v2118 = vadd.f32 %v2036, %v2106
      %v2119 = vadd.f32 %v2037, %v2109
      %v2122 = vrot.slane %v1398, 1
      %v2123 = vrot.slane %v1399, 1
      %v2124 = vsel %vm458, %v2122, %v2123
      %v2126 = vpack.c.bf16 %v2124, %v1844
      %s2127 = scalar_lea.vmem %s2, 28
      %v2128 = vld [vmem:[%s2127] sm:$0xf]
      %v2130 = vsel %vm308, %v2126, 0
      %v2133 = vsel %vm1471, %v2128, 0
      %2135 = vmatprep.subr.bf16.mxu0 0
      %2136 = vmatpush1.bf16.msra.mxu0 0
      %2137 = vmatprep.subr.bf16.mxu0 0
      %2138 = vmatpush1.bf16.msra.mxu0 0
      %2139 = vmatprep.subr.bf16.mxu0 0
      %2140 = vmatpush1.bf16.msra.mxu0 0
      %2141 = vmatprep.subr.bf16.mxu0 0
      %2142 = vmatpush1.bf16.msra.mxu0 0
      %2143 = vmatprep.subr.bf16.mxu0 0
      %2144 = vmatpush1.bf16.msra.mxu0 0
      %2145 = vmatprep.subr.bf16.mxu0 0
      %2146 = vmatpush1.bf16.msra.mxu0 0
      %2147 = vmatprep.subr.bf16.mxu0 0
      %2148 = vmatpush1.bf16.msra.mxu0 0
      %2149 = vmatprep.subr.bf16.mxu0 0
      %2150 = vmatpush1.bf16.msra.mxu0 %v2133
      %2151 = vmatprep.subr.bf16.mxu0 0
      %2152 = vmatpush2.bf16.msra.mxu0 0
      %2153 = vmatprep.subr.bf16.mxu0 0
      %2154 = vmatpush2.bf16.msra.mxu0 0
      %2155 = vmatprep.subr.bf16.mxu0 0
      %2156 = vmatpush2.bf16.msra.mxu0 0
      %2157 = vmatprep.subr.bf16.mxu0 0
      %2158 = vmatpush2.bf16.msra.mxu0 0
      %2159 = vmatprep.subr.bf16.mxu0 0
      %2160 = vmatpush2.bf16.msra.mxu0 0
      %2161 = vmatprep.subr.bf16.mxu0 0
      %2162 = vmatpush2.bf16.msra.mxu0 0
      %2163 = vmatprep.subr.bf16.mxu0 0
      %2164 = vmatpush2.bf16.msra.mxu0 0
      %2165 = vmatprep.subr.bf16.mxu0 0
      %2166 = vmatpush2.bf16.msra.mxu0 0
      %2167 = vmatprep.mubr.bf16.mxu0 0
      %2168 = vmatmul.mubr.bf16.gmra.mxu0 %v1463
      %v2169 = vpop.f32.mrf.mxu0
      %v2170 = vadd.f32 0.0, %v2169
      %v2171 = vpop.f32.mrf.mxu0
      %v2172 = vpop.f32.mrf.mxu0
      %v2173 = vadd.f32 0.0, %v2172
      %v2174 = vpop.f32.mrf.mxu0
      %2175 = vmatprep.mubr.bf16.mxu0 0
      %2176 = vmatmul.mubr.bf16.gmra.mxu0 %v1466
      %v2177 = vpop.f32.mrf.mxu0
      %v2178 = vadd.f32 0.0, %v2177
      %v2179 = vpop.f32.mrf.mxu0
      %v2180 = vpop.f32.mrf.mxu0
      %v2181 = vadd.f32 0.0, %v2180
      %v2182 = vpop.f32.mrf.mxu0
      %2183 = vmatprep.mubr.bf16.mxu0 0
      %2184 = vmatmul.mubr.bf16.gmra.mxu0 %v1469
      %v2185 = vpop.f32.mrf.mxu0
      %v2186 = vadd.f32 0.0, %v2185
      %v2187 = vpop.f32.mrf.mxu0
      %v2188 = vpop.f32.mrf.mxu0
      %v2189 = vadd.f32 0.0, %v2188
      %v2190 = vpop.f32.mrf.mxu0
      %2191 = vmatprep.mubr.bf16.mxu0 0
      %2192 = vmatmul.mubr.bf16.gmra.mxu0 %v2130
      %v2193 = vpop.f32.mrf.mxu0
      %v2194 = vadd.f32 0.0, %v2193
      %v2195 = vpop.f32.mrf.mxu0
      %v2196 = vpop.f32.mrf.mxu0
      %v2197 = vadd.f32 0.0, %v2196
      %v2198 = vpop.f32.mrf.mxu0
      %2199 = vdwg.mxu0
      %v2200 = vadd.f32 %v2112, %v2170
      %v2201 = vadd.f32 %v2113, %v2173
      %v2202 = vadd.f32 %v2114, %v2178
      %v2203 = vadd.f32 %v2115, %v2181
      %v2204 = vadd.f32 %v2116, %v2186
      %v2205 = vadd.f32 %v2117, %v2189
      %v2206 = vadd.f32 %v2118, %v2194
      %v2207 = vadd.f32 %v2119, %v2197
      %v2208 = vrot.slane %v1398, 2
      %v2209 = vrot.slane %v1399, 2
      %v2210 = vsel %vm658, %v2208, %v2209
      %v2212 = vpack.c.bf16 %v2210, %v1942
      %s2213 = scalar_lea.vmem %s2, 32
      %v2214 = vld [vmem:[%s2213] sm:$0xf]
      %v2216 = vsel %vm308, %v2212, 0
      %v2219 = vsel %vm1471, %v2214, 0
      %2221 = vmatprep.subr.bf16.mxu0 0
      %2222 = vmatpush1.bf16.msra.mxu0 0
      %2223 = vmatprep.subr.bf16.mxu0 0
      %2224 = vmatpush1.bf16.msra.mxu0 0
      %2225 = vmatprep.subr.bf16.mxu0 0
      %2226 = vmatpush1.bf16.msra.mxu0 0
      %2227 = vmatprep.subr.bf16.mxu0 0
      %2228 = vmatpush1.bf16.msra.mxu0 0
      %2229 = vmatprep.subr.bf16.mxu0 0
      %2230 = vmatpush1.bf16.msra.mxu0 0
      %2231 = vmatprep.subr.bf16.mxu0 0
      %2232 = vmatpush1.bf16.msra.mxu0 0
      %2233 = vmatprep.subr.bf16.mxu0 0
      %2234 = vmatpush1.bf16.msra.mxu0 0
      %2235 = vmatprep.subr.bf16.mxu0 0
      %2236 = vmatpush1.bf16.msra.mxu0 %v2219
      %2237 = vmatprep.subr.bf16.mxu0 0
      %2238 = vmatpush2.bf16.msra.mxu0 0
      %2239 = vmatprep.subr.bf16.mxu0 0
      %2240 = vmatpush2.bf16.msra.mxu0 0
      %2241 = vmatprep.subr.bf16.mxu0 0
      %2242 = vmatpush2.bf16.msra.mxu0 0
      %2243 = vmatprep.subr.bf16.mxu0 0
      %2244 = vmatpush2.bf16.msra.mxu0 0
      %2245 = vmatprep.subr.bf16.mxu0 0
      %2246 = vmatpush2.bf16.msra.mxu0 0
      %2247 = vmatprep.subr.bf16.mxu0 0
      %2248 = vmatpush2.bf16.msra.mxu0 0
      %2249 = vmatprep.subr.bf16.mxu0 0
      %2250 = vmatpush2.bf16.msra.mxu0 0
      %2251 = vmatprep.subr.bf16.mxu0 0
      %2252 = vmatpush2.bf16.msra.mxu0 0
      %2253 = vmatprep.mubr.bf16.mxu0 0
      %2254 = vmatmul.mubr.bf16.gmra.mxu0 %v1662
      %v2255 = vpop.f32.mrf.mxu0
      %v2256 = vadd.f32 0.0, %v2255
      %v2257 = vpop.f32.mrf.mxu0
      %v2258 = vpop.f32.mrf.mxu0
      %v2259 = vadd.f32 0.0, %v2258
      %v2260 = vpop.f32.mrf.mxu0
      %2261 = vmatprep.mubr.bf16.mxu0 0
      %2262 = vmatmul.mubr.bf16.gmra.mxu0 %v1665
      %v2263 = vpop.f32.mrf.mxu0
      %v2264 = vadd.f32 0.0, %v2263
      %v2265 = vpop.f32.mrf.mxu0
      %v2266 = vpop.f32.mrf.mxu0
      %v2267 = vadd.f32 0.0, %v2266
      %v2268 = vpop.f32.mrf.mxu0
      %2269 = vmatprep.mubr.bf16.mxu0 0
      %2270 = vmatmul.mubr.bf16.gmra.mxu0 %v1668
      %v2271 = vpop.f32.mrf.mxu0
      %v2272 = vadd.f32 0.0, %v2271
      %v2273 = vpop.f32.mrf.mxu0
      %v2274 = vpop.f32.mrf.mxu0
      %v2275 = vadd.f32 0.0, %v2274
      %v2276 = vpop.f32.mrf.mxu0
      %2277 = vmatprep.mubr.bf16.mxu0 0
      %2278 = vmatmul.mubr.bf16.gmra.mxu0 %v2216
      %v2279 = vpop.f32.mrf.mxu0
      %v2280 = vadd.f32 0.0, %v2279
      %v2281 = vpop.f32.mrf.mxu0
      %v2282 = vpop.f32.mrf.mxu0
      %v2283 = vadd.f32 0.0, %v2282
      %v2284 = vpop.f32.mrf.mxu0
      %2285 = vdwg.mxu0
      %v2286 = vadd.f32 %v2200, %v2256
      %v2287 = vadd.f32 %v2201, %v2259
      %v2288 = vadd.f32 %v2202, %v2264
      %v2289 = vadd.f32 %v2203, %v2267
      %v2290 = vadd.f32 %v2204, %v2272
      %v2291 = vadd.f32 %v2205, %v2275
      %v2292 = vadd.f32 %v2206, %v2280
      %v2293 = vadd.f32 %v2207, %v2283
      %v2294 = vld [vmem:[%s5] sm:$0x1]
      %v2296 = vlaneseq
      %v2297 = vshrl.u32 %v2296, 7
      %v2298 = vsub.s32 0, %v2297
      %v2299 = vrot.slane %v2294, %v2298
      %v2301 = vmul.f32 %v2286, %v2299
      %v2302 = vmul.f32 %v2287, %v2299
      %v2303 = vmul.f32 %v2288, %v2299
      %v2304 = vmul.f32 %v2289, %v2299
      %v2305 = vmul.f32 %v2290, %v2299
      %v2306 = vmul.f32 %v2291, %v2299
      %v2307 = vmul.f32 %v2292, %v2299
      %v2308 = vmul.f32 %v2293, %v2299
      %v2309 = vld [vmem:[%s6] sm:$0x1]
      %v2311 = vlaneseq
      %v2312 = vshrl.u32 %v2311, 7
      %v2313 = vsub.s32 0, %v2312
      %v2314 = vrot.slane %v2309, %v2313
      %v2316 = vadd.f32 %v2301, %v2314
      %v2317 = vadd.f32 %v2302, %v2314
      %v2318 = vadd.f32 %v2303, %v2314
      %v2319 = vadd.f32 %v2304, %v2314
      %v2320 = vadd.f32 %v2305, %v2314
      %v2321 = vadd.f32 %v2306, %v2314
      %v2322 = vadd.f32 %v2307, %v2314
      %v2323 = vadd.f32 %v2308, %v2314
      %v2324 = vmax.f32 %v2316, 0.0
      %v2325 = vmax.f32 %v2317, 0.0
      %v2326 = vmax.f32 %v2318, 0.0
      %v2327 = vmax.f32 %v2319, 0.0
      %v2328 = vmax.f32 %v2320, 0.0
      %v2329 = vmax.f32 %v2321, 0.0
      %v2330 = vmax.f32 %v2322, 0.0
      %v2331 = vmax.f32 %v2323, 0.0
      %2332 = vst.msk [vmem:[%s278] sm:$0xff] %vm308, %v2324
      %2333 = vst.msk [vmem:[%s278 + $0x8] sm:$0xff] %vm308, %v2325
      %2334 = vst.msk [vmem:[%s278 + $0x10] sm:$0xff] %vm308, %v2326
      %2335 = vst.msk [vmem:[%s278 + $0x18] sm:$0xff] %vm308, %v2327
      %2336 = vst.msk [vmem:[%s278 + $0x20] sm:$0xff] %vm308, %v2328
      %2337 = vst.msk [vmem:[%s278 + $0x28] sm:$0xff] %vm308, %v2329
      %2338 = vst.msk [vmem:[%s278 + $0x30] sm:$0xff] %vm308, %v2330
      %2339 = vst.msk [vmem:[%s278 + $0x38] sm:$0xff] %vm308, %v2331
      %p2340 = scmp.lt.s32.totalorder %s18, 1
      %s2341 = scalar_select %p2340, %s18, 1
      %s2342 = smul.addr %s2341, 8
      %s2343 = smul.addr %s2342, 8
      %s2344 = scalar_lea.vmem %s7, %s2343
      // Predicated region
      $region49: #{down_pallas.1} parent=47 // pred_check
        %p2345 = pneg %p188
      $region50: #{down_pallas.1} parent=47 // pred_check_branch
        %2347 = sbr.rel (%p2345) target = $region52
      $region51: #{down_pallas.1} parent=47 // pred_region
        _
      $region52: #{down_pallas.1} parent=47 // pred_fallthru
        _
    $region48: #{down_pallas.1} parent=5 // pred_fallthru
      _
    %p2348 = scmp.le.s32.totalorder 2, %s13
    // Predicated region
    $region53: #{down_pallas.1} parent=5 // pred_check
      %p2349 = pneg %p2348
    $region54: #{down_pallas.1} parent=5 // pred_check_branch
      %2351 = sbr.rel (%p2349) target = $region56
    $region55: #{down_pallas.1} parent=5 // pred_region
      %s2352 = ssub.s32 %s13, 2
      // Predicated region
      $region57: #{down_pallas.1} parent=55 // pred_check
        %p2353 = pneg %p194
      $region58: #{down_pallas.1} parent=55 // pred_check_branch
        %2355 = sbr.rel (%p2353) target = $region60
      $region59: #{down_pallas.1} parent=55 // pred_region
        %p2356 = scmp.lt.s32.totalorder %s19, 1
        %s2357 = scalar_select %p2356, %s19, 1
        %s2358 = smul.addr %s2357, 8
        %s2359 = smul.addr %s2358, 8
        %s2360 = scalar_lea.vmem %s7, %s2359
      $region60: #{down_pallas.1} parent=55 // pred_fallthru
        _
    $region56: #{down_pallas.1} parent=5 // pred_fallthru
      _
  $region6: #{down_pallas.1} parent=0 // loop_footer
    %s17 = sadd.s32 1, %s13
  $region7: #{down_pallas.1} parent=0 // loop_footer_branch
    %12 = sbr.rel target = $region3
  $region8: #{down_pallas.1} parent=0 // loop_exit
    _

</llo_original>
